<compile_context>
chip_gen: v7x
topology: tpu7x:2x2x1
jax: 0.10.0
libtpu: 0.0.40
codegen_flags: <defaults>
</compile_context>

<pallas_src>
import jax
import jax.numpy as jnp
from jax.experimental import pallas as pl
from jax.experimental.pallas import tpu as pltpu

# SELU constants (match torch.nn.functional.selu)
_SELU_ALPHA = 1.6732632423543772848170429916717
_SELU_SCALE = 1.0507009873554804934193349852946

_H1, _H2, _H3 = 5, 10, 5          # hidden widths of the reference Net
_LANES = 128
_SUBLANES = 8

# Per-generation tuning: max rows per grid step, VMEM budget used to cap the
# block, explicit scoped-VMEM limit handed to the compiler, #TensorCores.
_GEN_CFG = {
    5: dict(row_cap=128, vmem_budget=48 << 20, vmem_limit=64 << 20, cores=1),
    6: dict(row_cap=512, vmem_budget=48 << 20, vmem_limit=64 << 20, cores=1),
    7: dict(row_cap=256, vmem_budget=32 << 20, vmem_limit=48 << 20, cores=2),
}


def _round_up(a, m):
    return -(-a // m) * m


def _tpu_generation():
    try:
        kind = jax.devices()[0].device_kind.lower()
    except Exception:
        return 6
    for g in (7, 6, 5):
        if f"v{g}" in kind:
            return g
    return 6


def _selu_noscale(z):
    # SELU with the output scale folded into the NEXT layer's weights
    # (see pack_params).  exp(z) - 1 instead of expm1 keeps the transcendental
    # on the EUP slot; the extra absolute error (~1e-7) is far below 1e-5.
    return jnp.where(z > 0, z, _SELU_ALPHA * (jnp.exp(z) - 1.0))


def pack_params(params):
    """Flatten all weights (in,out) and biases (out,) into one f32 vector.

    The SELU output scale of each hidden activation is folded into the weights
    of the following layer:  scale*f(z) @ W == f(z) @ (scale*W).
    """
    s = jnp.float32(_SELU_SCALE)
    return jnp.concatenate([
        params["w1"].reshape(-1),       params["b1"].reshape(-1),
        (params["w2"] * s).reshape(-1), params["b2"].reshape(-1),
        (params["w3"] * s).reshape(-1), params["b3"].reshape(-1),
        (params["w4"] * s).reshape(-1), params["b4"].reshape(-1),
    ]).astype(jnp.float32)


def net_forward(x, params, *, max_block_rows=None):
    """x: (N, n_feature) float32.  params: w{1..4} as (in,out), b{1..4} as (out,)."""
    N, n_feature = x.shape
    n_output = params["w4"].shape[1]

    gen = _tpu_generation()
    cfg = _GEN_CFG[gen]

    # Offsets into the packed parameter vector (static Python ints).
    o_w1 = 0
    o_b1 = o_w1 + n_feature * _H1
    o_w2 = o_b1 + _H1
    o_b2 = o_w2 + _H1 * _H2
    o_w3 = o_b2 + _H2
    o_b3 = o_w3 + _H2 * _H3
    o_w4 = o_b3 + _H3
    o_b4 = o_w4 + _H3 * n_output
    n_params = o_b4 + n_output

    packed = pack_params(params)
    assert packed.shape == (n_params,)

    # ---------------- Block sizing (generation aware) ----------------
    rows = -(-N // _LANES)                       # lane-dense rows needed
    rows8 = _round_up(rows, _SUBLANES)

    # Per-row VMEM footprint: double-buffered input+output blocks plus ~12 live
    # lane-dense intermediates (worst case: spilled to VMEM by the compiler).
    bytes_per_row = ((n_feature + n_output) * 2 + 12) * _LANES * 4
    blk_cap_vmem = max(_SUBLANES,
                       (cfg["vmem_budget"] // bytes_per_row) // _SUBLANES * _SUBLANES)

    cap = min(cfg["row_cap"], blk_cap_vmem)
    if max_block_rows is not None:
        cap = min(cap, max(_SUBLANES, _round_up(max_block_rows, _SUBLANES)))

    block_rows = min(cap, rows8)
    # v7x: guarantee >=2 grid steps when there is enough work so the "parallel"
    # row axis shards across both TensorCores (this kernel is VALU/EUP-bound).
    if cfg["cores"] > 1 and rows8 >= 2 * _SUBLANES:
        block_rows = min(block_rows,
                         _round_up(-(-rows8 // cfg["cores"]), _SUBLANES))

    rows_padded = _round_up(rows8, block_rows)
    padded_n = rows_padded * _LANES
    grid = (rows_padded // block_rows,)

    # Lane-dense batch layout; pad only up to one tile boundary.
    xt = jnp.pad(x.T.astype(jnp.float32), ((0, 0), (0, padded_n - N)))
    x_slab = xt.reshape(n_feature, rows_padded, _LANES)
    # TODO(synk): for large n_feature, accept the (n_feature, rows, 128) layout
    # directly from the producer to avoid the wrapper-side transpose HBM pass.

    def kernel(p_ref, x_ref, o_ref):
        # Scalar accessors into the packed SMEM parameter vector.
        def w1(f, j): return p_ref[o_w1 + f * _H1 + j]
        def b1(j):    return p_ref[o_b1 + j]
        def w2(j, k): return p_ref[o_w2 + j * _H2 + k]
        def b2(k):    return p_ref[o_b2 + k]
        def w3(k, m): return p_ref[o_w3 + k * _H3 + m]
        def b3(m):    return p_ref[o_b3 + m]
        def w4(m, o): return p_ref[o_w4 + m * n_output + o]
        def b4(o):    return p_ref[o_b4 + o]

        # Layer 1 (n_feature -> 5), streamed over input features so at most
        # ~H1+1 lane-dense arrays are live regardless of n_feature.
        z1 = [None] * _H1
        for f in range(n_feature):
            xf = x_ref[f]                                  # (block_rows, 128)
            for j in range(_H1):
                t = w1(f, j) * xf
                z1[j] = t if z1[j] is None else z1[j] + t
        h1 = [_selu_noscale(z1[j] + b1(j)) for j in range(_H1)]

        # Layers 2 (5 -> 10) and 3 (10 -> 5) fused: stream each layer-2 channel
        # and accumulate straight into the 5 layer-3 pre-activations (limits
        # live lane-dense arrays to ~12).
        acc3 = [None] * _H3
        for k in range(_H2):
            z = b2(k) + w2(0, k) * h1[0]
            for j in range(1, _H1):
                z = z + w2(j, k) * h1[j]
            h2k = _selu_noscale(z)
            for m in range(_H3):
                term = w3(k, m) * h2k
                acc3[m] = term if acc3[m] is None else acc3[m] + term
        h3 = [_selu_noscale(acc3[m] + b3(m)) for m in range(_H3)]

        # Output layer (5 -> n_output): full-width lane-dense stores.
        for o in range(n_output):
            y = b4(o) + w4(0, o) * h3[0]
            for m in range(1, _H3):
                y = y + w4(m, o) * h3[m]
            o_ref[o] = y.astype(o_ref.dtype)

    out_slab = pl.pallas_call(
        kernel,
        out_shape=jax.ShapeDtypeStruct((n_output, rows_padded, _LANES), jnp.float32),
        grid=grid,
        in_specs=[
            # Single packed parameter vector, whole array resident in SMEM for
            # the entire grid (equivalent effect to scalar prefetch here).
            pl.BlockSpec(memory_space=pltpu.MemorySpace.SMEM),
            pl.BlockSpec((n_feature, block_rows, _LANES), lambda i: (0, i, 0)),
        ],
        out_specs=pl.BlockSpec((n_output, block_rows, _LANES), lambda i: (0, i, 0)),
        compiler_params=pltpu.CompilerParams(
            dimension_semantics=("parallel",),
            vmem_limit_bytes=cfg["vmem_limit"],
        ),
    )(packed, x_slab)

    # Undo the lane-dense layout and drop padded samples.
    return out_slab.reshape(n_output, padded_n)[:, :N].T


def init_params(key, n_feature, n_output):
    """Deterministic init mimicking torch.nn.Linear default (U(+/- 1/sqrt(fan_in))).
    Weights stored as (in_features, out_features); biases as (out_features,)."""
    dims = [(n_feature, _H1), (_H1, _H2), (_H2, _H3), (_H3, n_output)]
    params = {}
    for idx, (fan_in, fan_out) in enumerate(dims, start=1):
        key, kw, kb = jax.random.split(key, 3)
        bound = 1.0 / (fan_in ** 0.5)
        params[f"w{idx}"] = jax.random.uniform(
            kw, (fan_in, fan_out), jnp.float32, -bound, bound)
        params[f"b{idx}"] = jax.random.uniform(
            kb, (fan_out,), jnp.float32, -bound, bound)
    return params


def _selu_ref(x):
    return _SELU_SCALE * jnp.where(x > 0, x, _SELU_ALPHA * jnp.expm1(x))


def ref_forward(x, p):
    h = _selu_ref(x @ p["w1"] + p["b1"])
    h = _selu_ref(h @ p["w2"] + p["b2"])
    h = _selu_ref(h @ p["w3"] + p["b3"])
    return h @ p["w4"] + p["b4"]


if __name__ == "__main__":
    n_feature, n_output = 1, 1
    N = 1000  # deliberately NOT a multiple of 128 (original script uses 5000 points)

    # analogous to torch.linspace(0.0001, 1.0, N).unsqueeze(1)
    x = jnp.linspace(0.0001, 1.0, N, dtype=jnp.float32).reshape(N, n_feature)
    params = init_params(jax.random.PRNGKey(0), n_feature, n_output)

    y = net_forward(x, params)
    jax.block_until_ready(y)

    y_ref = ref_forward(x, params)
    assert y.shape == (N, n_output)
    assert jnp.allclose(y, y_ref, atol=1e-5, rtol=1e-5)

    print("KERNEL_OK")
</pallas_src>

<mosaic_0001>
module attributes {stable_mosaic.version = 11 : i64} {
  func.func @kernel(%arg0: i32, %arg1: memref<131xf32, #tpu.memory_space<smem>>, %arg2: memref<1x8x128xf32, #tpu.memory_space<vmem>>, %arg3: memref<1x8x128xf32, #tpu.memory_space<vmem>>) attributes {dimension_semantics = [#tpu.dimension_semantics<parallel>], iteration_bounds = array<i64: 1>, scalar_prefetch = 0 : i64, scratch_operands = 0 : i64, tpu.core_type = #tpu.core_type<tc>, window_params = [{transform_indices = @transform_0, window_bounds = array<i64: 131>}, {transform_indices = @transform_1, window_bounds = array<i64: 1, 8, 128>}, {transform_indices = @transform_2, window_bounds = array<i64: 1, 8, 128>}]} {
    %c0 = arith.constant 0 : index
    %c0_0 = arith.constant 0 : index
    %c0_1 = arith.constant 0 : index
    %0 = vector.load %arg2[%c0, %c0_0, %c0_1] : memref<1x8x128xf32, #tpu.memory_space<vmem>>, vector<1x8x128xf32>
    %1 = vector.shape_cast %0 : vector<1x8x128xf32> to vector<8x128xf32>
    %c0_2 = arith.constant 0 : index
    %2 = memref.load %arg1[%c0_2] : memref<131xf32, #tpu.memory_space<smem>>
    %3 = vector.broadcast %2 : f32 to vector<8x128xf32>
    %4 = arith.mulf %3, %1 : vector<8x128xf32>
    %c1 = arith.constant 1 : index
    %5 = memref.load %arg1[%c1] : memref<131xf32, #tpu.memory_space<smem>>
    %6 = vector.broadcast %5 : f32 to vector<8x128xf32>
    %7 = arith.mulf %6, %1 : vector<8x128xf32>
    %c2 = arith.constant 2 : index
    %8 = memref.load %arg1[%c2] : memref<131xf32, #tpu.memory_space<smem>>
    %9 = vector.broadcast %8 : f32 to vector<8x128xf32>
    %10 = arith.mulf %9, %1 : vector<8x128xf32>
    %c3 = arith.constant 3 : index
    %11 = memref.load %arg1[%c3] : memref<131xf32, #tpu.memory_space<smem>>
    %12 = vector.broadcast %11 : f32 to vector<8x128xf32>
    %13 = arith.mulf %12, %1 : vector<8x128xf32>
    %c4 = arith.constant 4 : index
    %14 = memref.load %arg1[%c4] : memref<131xf32, #tpu.memory_space<smem>>
    %15 = vector.broadcast %14 : f32 to vector<8x128xf32>
    %16 = arith.mulf %15, %1 : vector<8x128xf32>
    %c5 = arith.constant 5 : index
    %17 = memref.load %arg1[%c5] : memref<131xf32, #tpu.memory_space<smem>>
    %18 = vector.broadcast %17 : f32 to vector<8x128xf32>
    %19 = arith.addf %4, %18 : vector<8x128xf32>
    %cst = arith.constant 0.000000e+00 : f32
    %20 = vector.broadcast %cst : f32 to vector<8x128xf32>
    %21 = arith.cmpf ogt, %19, %20 : vector<8x128xf32>
    %22 = math.exp %19 : vector<8x128xf32>
    %cst_3 = arith.constant 1.000000e+00 : f32
    %23 = vector.broadcast %cst_3 : f32 to vector<8x128xf32>
    %24 = arith.subf %22, %23 : vector<8x128xf32>
    %cst_4 = arith.constant 1.67326319 : f32
    %25 = vector.broadcast %cst_4 : f32 to vector<8x128xf32>
    %26 = arith.mulf %25, %24 : vector<8x128xf32>
    %27 = arith.select %21, %19, %26 : vector<8x128xi1>, vector<8x128xf32>
    %c6 = arith.constant 6 : index
    %28 = memref.load %arg1[%c6] : memref<131xf32, #tpu.memory_space<smem>>
    %29 = vector.broadcast %28 : f32 to vector<8x128xf32>
    %30 = arith.addf %7, %29 : vector<8x128xf32>
    %cst_5 = arith.constant 0.000000e+00 : f32
    %31 = vector.broadcast %cst_5 : f32 to vector<8x128xf32>
    %32 = arith.cmpf ogt, %30, %31 : vector<8x128xf32>
    %33 = math.exp %30 : vector<8x128xf32>
    %cst_6 = arith.constant 1.000000e+00 : f32
    %34 = vector.broadcast %cst_6 : f32 to vector<8x128xf32>
    %35 = arith.subf %33, %34 : vector<8x128xf32>
    %cst_7 = arith.constant 1.67326319 : f32
    %36 = vector.broadcast %cst_7 : f32 to vector<8x128xf32>
    %37 = arith.mulf %36, %35 : vector<8x128xf32>
    %38 = arith.select %32, %30, %37 : vector<8x128xi1>, vector<8x128xf32>
    %c7 = arith.constant 7 : index
    %39 = memref.load %arg1[%c7] : memref<131xf32, #tpu.memory_space<smem>>
    %40 = vector.broadcast %39 : f32 to vector<8x128xf32>
    %41 = arith.addf %10, %40 : vector<8x128xf32>
    %cst_8 = arith.constant 0.000000e+00 : f32
    %42 = vector.broadcast %cst_8 : f32 to vector<8x128xf32>
    %43 = arith.cmpf ogt, %41, %42 : vector<8x128xf32>
    %44 = math.exp %41 : vector<8x128xf32>
    %cst_9 = arith.constant 1.000000e+00 : f32
    %45 = vector.broadcast %cst_9 : f32 to vector<8x128xf32>
    %46 = arith.subf %44, %45 : vector<8x128xf32>
    %cst_10 = arith.constant 1.67326319 : f32
    %47 = vector.broadcast %cst_10 : f32 to vector<8x128xf32>
    %48 = arith.mulf %47, %46 : vector<8x128xf32>
    %49 = arith.select %43, %41, %48 : vector<8x128xi1>, vector<8x128xf32>
    %c8 = arith.constant 8 : index
    %50 = memref.load %arg1[%c8] : memref<131xf32, #tpu.memory_space<smem>>
    %51 = vector.broadcast %50 : f32 to vector<8x128xf32>
    %52 = arith.addf %13, %51 : vector<8x128xf32>
    %cst_11 = arith.constant 0.000000e+00 : f32
    %53 = vector.broadcast %cst_11 : f32 to vector<8x128xf32>
    %54 = arith.cmpf ogt, %52, %53 : vector<8x128xf32>
    %55 = math.exp %52 : vector<8x128xf32>
    %cst_12 = arith.constant 1.000000e+00 : f32
    %56 = vector.broadcast %cst_12 : f32 to vector<8x128xf32>
    %57 = arith.subf %55, %56 : vector<8x128xf32>
    %cst_13 = arith.constant 1.67326319 : f32
    %58 = vector.broadcast %cst_13 : f32 to vector<8x128xf32>
    %59 = arith.mulf %58, %57 : vector<8x128xf32>
    %60 = arith.select %54, %52, %59 : vector<8x128xi1>, vector<8x128xf32>
    %c9 = arith.constant 9 : index
    %61 = memref.load %arg1[%c9] : memref<131xf32, #tpu.memory_space<smem>>
    %62 = vector.broadcast %61 : f32 to vector<8x128xf32>
    %63 = arith.addf %16, %62 : vector<8x128xf32>
    %cst_14 = arith.constant 0.000000e+00 : f32
    %64 = vector.broadcast %cst_14 : f32 to vector<8x128xf32>
    %65 = arith.cmpf ogt, %63, %64 : vector<8x128xf32>
    %66 = math.exp %63 : vector<8x128xf32>
    %cst_15 = arith.constant 1.000000e+00 : f32
    %67 = vector.broadcast %cst_15 : f32 to vector<8x128xf32>
    %68 = arith.subf %66, %67 : vector<8x128xf32>
    %cst_16 = arith.constant 1.67326319 : f32
    %69 = vector.broadcast %cst_16 : f32 to vector<8x128xf32>
    %70 = arith.mulf %69, %68 : vector<8x128xf32>
    %71 = arith.select %65, %63, %70 : vector<8x128xi1>, vector<8x128xf32>
    %c60 = arith.constant 60 : index
    %72 = memref.load %arg1[%c60] : memref<131xf32, #tpu.memory_space<smem>>
    %c10 = arith.constant 10 : index
    %73 = memref.load %arg1[%c10] : memref<131xf32, #tpu.memory_space<smem>>
    %74 = vector.broadcast %73 : f32 to vector<8x128xf32>
    %75 = arith.mulf %74, %27 : vector<8x128xf32>
    %76 = vector.broadcast %72 : f32 to vector<8x128xf32>
    %77 = arith.addf %76, %75 : vector<8x128xf32>
    %c20 = arith.constant 20 : index
    %78 = memref.load %arg1[%c20] : memref<131xf32, #tpu.memory_space<smem>>
    %79 = vector.broadcast %78 : f32 to vector<8x128xf32>
    %80 = arith.mulf %79, %38 : vector<8x128xf32>
    %81 = arith.addf %77, %80 : vector<8x128xf32>
    %c30 = arith.constant 30 : index
    %82 = memref.load %arg1[%c30] : memref<131xf32, #tpu.memory_space<smem>>
    %83 = vector.broadcast %82 : f32 to vector<8x128xf32>
    %84 = arith.mulf %83, %49 : vector<8x128xf32>
    %85 = arith.addf %81, %84 : vector<8x128xf32>
    %c40 = arith.constant 40 : index
    %86 = memref.load %arg1[%c40] : memref<131xf32, #tpu.memory_space<smem>>
    %87 = vector.broadcast %86 : f32 to vector<8x128xf32>
    %88 = arith.mulf %87, %60 : vector<8x128xf32>
    %89 = arith.addf %85, %88 : vector<8x128xf32>
    %c50 = arith.constant 50 : index
    %90 = memref.load %arg1[%c50] : memref<131xf32, #tpu.memory_space<smem>>
    %91 = vector.broadcast %90 : f32 to vector<8x128xf32>
    %92 = arith.mulf %91, %71 : vector<8x128xf32>
    %93 = arith.addf %89, %92 : vector<8x128xf32>
    %cst_17 = arith.constant 0.000000e+00 : f32
    %94 = vector.broadcast %cst_17 : f32 to vector<8x128xf32>
    %95 = arith.cmpf ogt, %93, %94 : vector<8x128xf32>
    %96 = math.exp %93 : vector<8x128xf32>
    %cst_18 = arith.constant 1.000000e+00 : f32
    %97 = vector.broadcast %cst_18 : f32 to vector<8x128xf32>
    %98 = arith.subf %96, %97 : vector<8x128xf32>
    %cst_19 = arith.constant 1.67326319 : f32
    %99 = vector.broadcast %cst_19 : f32 to vector<8x128xf32>
    %100 = arith.mulf %99, %98 : vector<8x128xf32>
    %101 = arith.select %95, %93, %100 : vector<8x128xi1>, vector<8x128xf32>
    %c70 = arith.constant 70 : index
    %102 = memref.load %arg1[%c70] : memref<131xf32, #tpu.memory_space<smem>>
    %103 = vector.broadcast %102 : f32 to vector<8x128xf32>
    %104 = arith.mulf %103, %101 : vector<8x128xf32>
    %c71 = arith.constant 71 : index
    %105 = memref.load %arg1[%c71] : memref<131xf32, #tpu.memory_space<smem>>
    %106 = vector.broadcast %105 : f32 to vector<8x128xf32>
    %107 = arith.mulf %106, %101 : vector<8x128xf32>
    %c72 = arith.constant 72 : index
    %108 = memref.load %arg1[%c72] : memref<131xf32, #tpu.memory_space<smem>>
    %109 = vector.broadcast %108 : f32 to vector<8x128xf32>
    %110 = arith.mulf %109, %101 : vector<8x128xf32>
    %c73 = arith.constant 73 : index
    %111 = memref.load %arg1[%c73] : memref<131xf32, #tpu.memory_space<smem>>
    %112 = vector.broadcast %111 : f32 to vector<8x128xf32>
    %113 = arith.mulf %112, %101 : vector<8x128xf32>
    %c74 = arith.constant 74 : index
    %114 = memref.load %arg1[%c74] : memref<131xf32, #tpu.memory_space<smem>>
    %115 = vector.broadcast %114 : f32 to vector<8x128xf32>
    %116 = arith.mulf %115, %101 : vector<8x128xf32>
    %c61 = arith.constant 61 : index
    %117 = memref.load %arg1[%c61] : memref<131xf32, #tpu.memory_space<smem>>
    %c11 = arith.constant 11 : index
    %118 = memref.load %arg1[%c11] : memref<131xf32, #tpu.memory_space<smem>>
    %119 = vector.broadcast %118 : f32 to vector<8x128xf32>
    %120 = arith.mulf %119, %27 : vector<8x128xf32>
    %121 = vector.broadcast %117 : f32 to vector<8x128xf32>
    %122 = arith.addf %121, %120 : vector<8x128xf32>
    %c21 = arith.constant 21 : index
    %123 = memref.load %arg1[%c21] : memref<131xf32, #tpu.memory_space<smem>>
    %124 = vector.broadcast %123 : f32 to vector<8x128xf32>
    %125 = arith.mulf %124, %38 : vector<8x128xf32>
    %126 = arith.addf %122, %125 : vector<8x128xf32>
    %c31 = arith.constant 31 : index
    %127 = memref.load %arg1[%c31] : memref<131xf32, #tpu.memory_space<smem>>
    %128 = vector.broadcast %127 : f32 to vector<8x128xf32>
    %129 = arith.mulf %128, %49 : vector<8x128xf32>
    %130 = arith.addf %126, %129 : vector<8x128xf32>
    %c41 = arith.constant 41 : index
    %131 = memref.load %arg1[%c41] : memref<131xf32, #tpu.memory_space<smem>>
    %132 = vector.broadcast %131 : f32 to vector<8x128xf32>
    %133 = arith.mulf %132, %60 : vector<8x128xf32>
    %134 = arith.addf %130, %133 : vector<8x128xf32>
    %c51 = arith.constant 51 : index
    %135 = memref.load %arg1[%c51] : memref<131xf32, #tpu.memory_space<smem>>
    %136 = vector.broadcast %135 : f32 to vector<8x128xf32>
    %137 = arith.mulf %136, %71 : vector<8x128xf32>
    %138 = arith.addf %134, %137 : vector<8x128xf32>
    %cst_20 = arith.constant 0.000000e+00 : f32
    %139 = vector.broadcast %cst_20 : f32 to vector<8x128xf32>
    %140 = arith.cmpf ogt, %138, %139 : vector<8x128xf32>
    %141 = math.exp %138 : vector<8x128xf32>
    %cst_21 = arith.constant 1.000000e+00 : f32
    %142 = vector.broadcast %cst_21 : f32 to vector<8x128xf32>
    %143 = arith.subf %141, %142 : vector<8x128xf32>
    %cst_22 = arith.constant 1.67326319 : f32
    %144 = vector.broadcast %cst_22 : f32 to vector<8x128xf32>
    %145 = arith.mulf %144, %143 : vector<8x128xf32>
    %146 = arith.select %140, %138, %145 : vector<8x128xi1>, vector<8x128xf32>
    %c75 = arith.constant 75 : index
    %147 = memref.load %arg1[%c75] : memref<131xf32, #tpu.memory_space<smem>>
    %148 = vector.broadcast %147 : f32 to vector<8x128xf32>
    %149 = arith.mulf %148, %146 : vector<8x128xf32>
    %150 = arith.addf %104, %149 : vector<8x128xf32>
    %c76 = arith.constant 76 : index
    %151 = memref.load %arg1[%c76] : memref<131xf32, #tpu.memory_space<smem>>
    %152 = vector.broadcast %151 : f32 to vector<8x128xf32>
    %153 = arith.mulf %152, %146 : vector<8x128xf32>
    %154 = arith.addf %107, %153 : vector<8x128xf32>
    %c77 = arith.constant 77 : index
    %155 = memref.load %arg1[%c77] : memref<131xf32, #tpu.memory_space<smem>>
    %156 = vector.broadcast %155 : f32 to vector<8x128xf32>
    %157 = arith.mulf %156, %146 : vector<8x128xf32>
    %158 = arith.addf %110, %157 : vector<8x128xf32>
    %c78 = arith.constant 78 : index
    %159 = memref.load %arg1[%c78] : memref<131xf32, #tpu.memory_space<smem>>
    %160 = vector.broadcast %159 : f32 to vector<8x128xf32>
    %161 = arith.mulf %160, %146 : vector<8x128xf32>
    %162 = arith.addf %113, %161 : vector<8x128xf32>
    %c79 = arith.constant 79 : index
    %163 = memref.load %arg1[%c79] : memref<131xf32, #tpu.memory_space<smem>>
    %164 = vector.broadcast %163 : f32 to vector<8x128xf32>
    %165 = arith.mulf %164, %146 : vector<8x128xf32>
    %166 = arith.addf %116, %165 : vector<8x128xf32>
    %c62 = arith.constant 62 : index
    %167 = memref.load %arg1[%c62] : memref<131xf32, #tpu.memory_space<smem>>
    %c12 = arith.constant 12 : index
    %168 = memref.load %arg1[%c12] : memref<131xf32, #tpu.memory_space<smem>>
    %169 = vector.broadcast %168 : f32 to vector<8x128xf32>
    %170 = arith.mulf %169, %27 : vector<8x128xf32>
    %171 = vector.broadcast %167 : f32 to vector<8x128xf32>
    %172 = arith.addf %171, %170 : vector<8x128xf32>
    %c22 = arith.constant 22 : index
    %173 = memref.load %arg1[%c22] : memref<131xf32, #tpu.memory_space<smem>>
    %174 = vector.broadcast %173 : f32 to vector<8x128xf32>
    %175 = arith.mulf %174, %38 : vector<8x128xf32>
    %176 = arith.addf %172, %175 : vector<8x128xf32>
    %c32 = arith.constant 32 : index
    %177 = memref.load %arg1[%c32] : memref<131xf32, #tpu.memory_space<smem>>
    %178 = vector.broadcast %177 : f32 to vector<8x128xf32>
    %179 = arith.mulf %178, %49 : vector<8x128xf32>
    %180 = arith.addf %176, %179 : vector<8x128xf32>
    %c42 = arith.constant 42 : index
    %181 = memref.load %arg1[%c42] : memref<131xf32, #tpu.memory_space<smem>>
    %182 = vector.broadcast %181 : f32 to vector<8x128xf32>
    %183 = arith.mulf %182, %60 : vector<8x128xf32>
    %184 = arith.addf %180, %183 : vector<8x128xf32>
    %c52 = arith.constant 52 : index
    %185 = memref.load %arg1[%c52] : memref<131xf32, #tpu.memory_space<smem>>
    %186 = vector.broadcast %185 : f32 to vector<8x128xf32>
    %187 = arith.mulf %186, %71 : vector<8x128xf32>
    %188 = arith.addf %184, %187 : vector<8x128xf32>
    %cst_23 = arith.constant 0.000000e+00 : f32
    %189 = vector.broadcast %cst_23 : f32 to vector<8x128xf32>
    %190 = arith.cmpf ogt, %188, %189 : vector<8x128xf32>
    %191 = math.exp %188 : vector<8x128xf32>
    %cst_24 = arith.constant 1.000000e+00 : f32
    %192 = vector.broadcast %cst_24 : f32 to vector<8x128xf32>
    %193 = arith.subf %191, %192 : vector<8x128xf32>
    %cst_25 = arith.constant 1.67326319 : f32
    %194 = vector.broadcast %cst_25 : f32 to vector<8x128xf32>
    %195 = arith.mulf %194, %193 : vector<8x128xf32>
    %196 = arith.select %190, %188, %195 : vector<8x128xi1>, vector<8x128xf32>
    %c80 = arith.constant 80 : index
    %197 = memref.load %arg1[%c80] : memref<131xf32, #tpu.memory_space<smem>>
    %198 = vector.broadcast %197 : f32 to vector<8x128xf32>
    %199 = arith.mulf %198, %196 : vector<8x128xf32>
    %200 = arith.addf %150, %199 : vector<8x128xf32>
    %c81 = arith.constant 81 : index
    %201 = memref.load %arg1[%c81] : memref<131xf32, #tpu.memory_space<smem>>
    %202 = vector.broadcast %201 : f32 to vector<8x128xf32>
    %203 = arith.mulf %202, %196 : vector<8x128xf32>
    %204 = arith.addf %154, %203 : vector<8x128xf32>
    %c82 = arith.constant 82 : index
    %205 = memref.load %arg1[%c82] : memref<131xf32, #tpu.memory_space<smem>>
    %206 = vector.broadcast %205 : f32 to vector<8x128xf32>
    %207 = arith.mulf %206, %196 : vector<8x128xf32>
    %208 = arith.addf %158, %207 : vector<8x128xf32>
    %c83 = arith.constant 83 : index
    %209 = memref.load %arg1[%c83] : memref<131xf32, #tpu.memory_space<smem>>
    %210 = vector.broadcast %209 : f32 to vector<8x128xf32>
    %211 = arith.mulf %210, %196 : vector<8x128xf32>
    %212 = arith.addf %162, %211 : vector<8x128xf32>
    %c84 = arith.constant 84 : index
    %213 = memref.load %arg1[%c84] : memref<131xf32, #tpu.memory_space<smem>>
    %214 = vector.broadcast %213 : f32 to vector<8x128xf32>
    %215 = arith.mulf %214, %196 : vector<8x128xf32>
    %216 = arith.addf %166, %215 : vector<8x128xf32>
    %c63 = arith.constant 63 : index
    %217 = memref.load %arg1[%c63] : memref<131xf32, #tpu.memory_space<smem>>
    %c13 = arith.constant 13 : index
    %218 = memref.load %arg1[%c13] : memref<131xf32, #tpu.memory_space<smem>>
    %219 = vector.broadcast %218 : f32 to vector<8x128xf32>
    %220 = arith.mulf %219, %27 : vector<8x128xf32>
    %221 = vector.broadcast %217 : f32 to vector<8x128xf32>
    %222 = arith.addf %221, %220 : vector<8x128xf32>
    %c23 = arith.constant 23 : index
    %223 = memref.load %arg1[%c23] : memref<131xf32, #tpu.memory_space<smem>>
    %224 = vector.broadcast %223 : f32 to vector<8x128xf32>
    %225 = arith.mulf %224, %38 : vector<8x128xf32>
    %226 = arith.addf %222, %225 : vector<8x128xf32>
    %c33 = arith.constant 33 : index
    %227 = memref.load %arg1[%c33] : memref<131xf32, #tpu.memory_space<smem>>
    %228 = vector.broadcast %227 : f32 to vector<8x128xf32>
    %229 = arith.mulf %228, %49 : vector<8x128xf32>
    %230 = arith.addf %226, %229 : vector<8x128xf32>
    %c43 = arith.constant 43 : index
    %231 = memref.load %arg1[%c43] : memref<131xf32, #tpu.memory_space<smem>>
    %232 = vector.broadcast %231 : f32 to vector<8x128xf32>
    %233 = arith.mulf %232, %60 : vector<8x128xf32>
    %234 = arith.addf %230, %233 : vector<8x128xf32>
    %c53 = arith.constant 53 : index
    %235 = memref.load %arg1[%c53] : memref<131xf32, #tpu.memory_space<smem>>
    %236 = vector.broadcast %235 : f32 to vector<8x128xf32>
    %237 = arith.mulf %236, %71 : vector<8x128xf32>
    %238 = arith.addf %234, %237 : vector<8x128xf32>
    %cst_26 = arith.constant 0.000000e+00 : f32
    %239 = vector.broadcast %cst_26 : f32 to vector<8x128xf32>
    %240 = arith.cmpf ogt, %238, %239 : vector<8x128xf32>
    %241 = math.exp %238 : vector<8x128xf32>
    %cst_27 = arith.constant 1.000000e+00 : f32
    %242 = vector.broadcast %cst_27 : f32 to vector<8x128xf32>
    %243 = arith.subf %241, %242 : vector<8x128xf32>
    %cst_28 = arith.constant 1.67326319 : f32
    %244 = vector.broadcast %cst_28 : f32 to vector<8x128xf32>
    %245 = arith.mulf %244, %243 : vector<8x128xf32>
    %246 = arith.select %240, %238, %245 : vector<8x128xi1>, vector<8x128xf32>
    %c85 = arith.constant 85 : index
    %247 = memref.load %arg1[%c85] : memref<131xf32, #tpu.memory_space<smem>>
    %248 = vector.broadcast %247 : f32 to vector<8x128xf32>
    %249 = arith.mulf %248, %246 : vector<8x128xf32>
    %250 = arith.addf %200, %249 : vector<8x128xf32>
    %c86 = arith.constant 86 : index
    %251 = memref.load %arg1[%c86] : memref<131xf32, #tpu.memory_space<smem>>
    %252 = vector.broadcast %251 : f32 to vector<8x128xf32>
    %253 = arith.mulf %252, %246 : vector<8x128xf32>
    %254 = arith.addf %204, %253 : vector<8x128xf32>
    %c87 = arith.constant 87 : index
    %255 = memref.load %arg1[%c87] : memref<131xf32, #tpu.memory_space<smem>>
    %256 = vector.broadcast %255 : f32 to vector<8x128xf32>
    %257 = arith.mulf %256, %246 : vector<8x128xf32>
    %258 = arith.addf %208, %257 : vector<8x128xf32>
    %c88 = arith.constant 88 : index
    %259 = memref.load %arg1[%c88] : memref<131xf32, #tpu.memory_space<smem>>
    %260 = vector.broadcast %259 : f32 to vector<8x128xf32>
    %261 = arith.mulf %260, %246 : vector<8x128xf32>
    %262 = arith.addf %212, %261 : vector<8x128xf32>
    %c89 = arith.constant 89 : index
    %263 = memref.load %arg1[%c89] : memref<131xf32, #tpu.memory_space<smem>>
    %264 = vector.broadcast %263 : f32 to vector<8x128xf32>
    %265 = arith.mulf %264, %246 : vector<8x128xf32>
    %266 = arith.addf %216, %265 : vector<8x128xf32>
    %c64 = arith.constant 64 : index
    %267 = memref.load %arg1[%c64] : memref<131xf32, #tpu.memory_space<smem>>
    %c14 = arith.constant 14 : index
    %268 = memref.load %arg1[%c14] : memref<131xf32, #tpu.memory_space<smem>>
    %269 = vector.broadcast %268 : f32 to vector<8x128xf32>
    %270 = arith.mulf %269, %27 : vector<8x128xf32>
    %271 = vector.broadcast %267 : f32 to vector<8x128xf32>
    %272 = arith.addf %271, %270 : vector<8x128xf32>
    %c24 = arith.constant 24 : index
    %273 = memref.load %arg1[%c24] : memref<131xf32, #tpu.memory_space<smem>>
    %274 = vector.broadcast %273 : f32 to vector<8x128xf32>
    %275 = arith.mulf %274, %38 : vector<8x128xf32>
    %276 = arith.addf %272, %275 : vector<8x128xf32>
    %c34 = arith.constant 34 : index
    %277 = memref.load %arg1[%c34] : memref<131xf32, #tpu.memory_space<smem>>
    %278 = vector.broadcast %277 : f32 to vector<8x128xf32>
    %279 = arith.mulf %278, %49 : vector<8x128xf32>
    %280 = arith.addf %276, %279 : vector<8x128xf32>
    %c44 = arith.constant 44 : index
    %281 = memref.load %arg1[%c44] : memref<131xf32, #tpu.memory_space<smem>>
    %282 = vector.broadcast %281 : f32 to vector<8x128xf32>
    %283 = arith.mulf %282, %60 : vector<8x128xf32>
    %284 = arith.addf %280, %283 : vector<8x128xf32>
    %c54 = arith.constant 54 : index
    %285 = memref.load %arg1[%c54] : memref<131xf32, #tpu.memory_space<smem>>
    %286 = vector.broadcast %285 : f32 to vector<8x128xf32>
    %287 = arith.mulf %286, %71 : vector<8x128xf32>
    %288 = arith.addf %284, %287 : vector<8x128xf32>
    %cst_29 = arith.constant 0.000000e+00 : f32
    %289 = vector.broadcast %cst_29 : f32 to vector<8x128xf32>
    %290 = arith.cmpf ogt, %288, %289 : vector<8x128xf32>
    %291 = math.exp %288 : vector<8x128xf32>
    %cst_30 = arith.constant 1.000000e+00 : f32
    %292 = vector.broadcast %cst_30 : f32 to vector<8x128xf32>
    %293 = arith.subf %291, %292 : vector<8x128xf32>
    %cst_31 = arith.constant 1.67326319 : f32
    %294 = vector.broadcast %cst_31 : f32 to vector<8x128xf32>
    %295 = arith.mulf %294, %293 : vector<8x128xf32>
    %296 = arith.select %290, %288, %295 : vector<8x128xi1>, vector<8x128xf32>
    %c90 = arith.constant 90 : index
    %297 = memref.load %arg1[%c90] : memref<131xf32, #tpu.memory_space<smem>>
    %298 = vector.broadcast %297 : f32 to vector<8x128xf32>
    %299 = arith.mulf %298, %296 : vector<8x128xf32>
    %300 = arith.addf %250, %299 : vector<8x128xf32>
    %c91 = arith.constant 91 : index
    %301 = memref.load %arg1[%c91] : memref<131xf32, #tpu.memory_space<smem>>
    %302 = vector.broadcast %301 : f32 to vector<8x128xf32>
    %303 = arith.mulf %302, %296 : vector<8x128xf32>
    %304 = arith.addf %254, %303 : vector<8x128xf32>
    %c92 = arith.constant 92 : index
    %305 = memref.load %arg1[%c92] : memref<131xf32, #tpu.memory_space<smem>>
    %306 = vector.broadcast %305 : f32 to vector<8x128xf32>
    %307 = arith.mulf %306, %296 : vector<8x128xf32>
    %308 = arith.addf %258, %307 : vector<8x128xf32>
    %c93 = arith.constant 93 : index
    %309 = memref.load %arg1[%c93] : memref<131xf32, #tpu.memory_space<smem>>
    %310 = vector.broadcast %309 : f32 to vector<8x128xf32>
    %311 = arith.mulf %310, %296 : vector<8x128xf32>
    %312 = arith.addf %262, %311 : vector<8x128xf32>
    %c94 = arith.constant 94 : index
    %313 = memref.load %arg1[%c94] : memref<131xf32, #tpu.memory_space<smem>>
    %314 = vector.broadcast %313 : f32 to vector<8x128xf32>
    %315 = arith.mulf %314, %296 : vector<8x128xf32>
    %316 = arith.addf %266, %315 : vector<8x128xf32>
    %c65 = arith.constant 65 : index
    %317 = memref.load %arg1[%c65] : memref<131xf32, #tpu.memory_space<smem>>
    %c15 = arith.constant 15 : index
    %318 = memref.load %arg1[%c15] : memref<131xf32, #tpu.memory_space<smem>>
    %319 = vector.broadcast %318 : f32 to vector<8x128xf32>
    %320 = arith.mulf %319, %27 : vector<8x128xf32>
    %321 = vector.broadcast %317 : f32 to vector<8x128xf32>
    %322 = arith.addf %321, %320 : vector<8x128xf32>
    %c25 = arith.constant 25 : index
    %323 = memref.load %arg1[%c25] : memref<131xf32, #tpu.memory_space<smem>>
    %324 = vector.broadcast %323 : f32 to vector<8x128xf32>
    %325 = arith.mulf %324, %38 : vector<8x128xf32>
    %326 = arith.addf %322, %325 : vector<8x128xf32>
    %c35 = arith.constant 35 : index
    %327 = memref.load %arg1[%c35] : memref<131xf32, #tpu.memory_space<smem>>
    %328 = vector.broadcast %327 : f32 to vector<8x128xf32>
    %329 = arith.mulf %328, %49 : vector<8x128xf32>
    %330 = arith.addf %326, %329 : vector<8x128xf32>
    %c45 = arith.constant 45 : index
    %331 = memref.load %arg1[%c45] : memref<131xf32, #tpu.memory_space<smem>>
    %332 = vector.broadcast %331 : f32 to vector<8x128xf32>
    %333 = arith.mulf %332, %60 : vector<8x128xf32>
    %334 = arith.addf %330, %333 : vector<8x128xf32>
    %c55 = arith.constant 55 : index
    %335 = memref.load %arg1[%c55] : memref<131xf32, #tpu.memory_space<smem>>
    %336 = vector.broadcast %335 : f32 to vector<8x128xf32>
    %337 = arith.mulf %336, %71 : vector<8x128xf32>
    %338 = arith.addf %334, %337 : vector<8x128xf32>
    %cst_32 = arith.constant 0.000000e+00 : f32
    %339 = vector.broadcast %cst_32 : f32 to vector<8x128xf32>
    %340 = arith.cmpf ogt, %338, %339 : vector<8x128xf32>
    %341 = math.exp %338 : vector<8x128xf32>
    %cst_33 = arith.constant 1.000000e+00 : f32
    %342 = vector.broadcast %cst_33 : f32 to vector<8x128xf32>
    %343 = arith.subf %341, %342 : vector<8x128xf32>
    %cst_34 = arith.constant 1.67326319 : f32
    %344 = vector.broadcast %cst_34 : f32 to vector<8x128xf32>
    %345 = arith.mulf %344, %343 : vector<8x128xf32>
    %346 = arith.select %340, %338, %345 : vector<8x128xi1>, vector<8x128xf32>
    %c95 = arith.constant 95 : index
    %347 = memref.load %arg1[%c95] : memref<131xf32, #tpu.memory_space<smem>>
    %348 = vector.broadcast %347 : f32 to vector<8x128xf32>
    %349 = arith.mulf %348, %346 : vector<8x128xf32>
    %350 = arith.addf %300, %349 : vector<8x128xf32>
    %c96 = arith.constant 96 : index
    %351 = memref.load %arg1[%c96] : memref<131xf32, #tpu.memory_space<smem>>
    %352 = vector.broadcast %351 : f32 to vector<8x128xf32>
    %353 = arith.mulf %352, %346 : vector<8x128xf32>
    %354 = arith.addf %304, %353 : vector<8x128xf32>
    %c97 = arith.constant 97 : index
    %355 = memref.load %arg1[%c97] : memref<131xf32, #tpu.memory_space<smem>>
    %356 = vector.broadcast %355 : f32 to vector<8x128xf32>
    %357 = arith.mulf %356, %346 : vector<8x128xf32>
    %358 = arith.addf %308, %357 : vector<8x128xf32>
    %c98 = arith.constant 98 : index
    %359 = memref.load %arg1[%c98] : memref<131xf32, #tpu.memory_space<smem>>
    %360 = vector.broadcast %359 : f32 to vector<8x128xf32>
    %361 = arith.mulf %360, %346 : vector<8x128xf32>
    %362 = arith.addf %312, %361 : vector<8x128xf32>
    %c99 = arith.constant 99 : index
    %363 = memref.load %arg1[%c99] : memref<131xf32, #tpu.memory_space<smem>>
    %364 = vector.broadcast %363 : f32 to vector<8x128xf32>
    %365 = arith.mulf %364, %346 : vector<8x128xf32>
    %366 = arith.addf %316, %365 : vector<8x128xf32>
    %c66 = arith.constant 66 : index
    %367 = memref.load %arg1[%c66] : memref<131xf32, #tpu.memory_space<smem>>
    %c16 = arith.constant 16 : index
    %368 = memref.load %arg1[%c16] : memref<131xf32, #tpu.memory_space<smem>>
    %369 = vector.broadcast %368 : f32 to vector<8x128xf32>
    %370 = arith.mulf %369, %27 : vector<8x128xf32>
    %371 = vector.broadcast %367 : f32 to vector<8x128xf32>
    %372 = arith.addf %371, %370 : vector<8x128xf32>
    %c26 = arith.constant 26 : index
    %373 = memref.load %arg1[%c26] : memref<131xf32, #tpu.memory_space<smem>>
    %374 = vector.broadcast %373 : f32 to vector<8x128xf32>
    %375 = arith.mulf %374, %38 : vector<8x128xf32>
    %376 = arith.addf %372, %375 : vector<8x128xf32>
    %c36 = arith.constant 36 : index
    %377 = memref.load %arg1[%c36] : memref<131xf32, #tpu.memory_space<smem>>
    %378 = vector.broadcast %377 : f32 to vector<8x128xf32>
    %379 = arith.mulf %378, %49 : vector<8x128xf32>
    %380 = arith.addf %376, %379 : vector<8x128xf32>
    %c46 = arith.constant 46 : index
    %381 = memref.load %arg1[%c46] : memref<131xf32, #tpu.memory_space<smem>>
    %382 = vector.broadcast %381 : f32 to vector<8x128xf32>
    %383 = arith.mulf %382, %60 : vector<8x128xf32>
    %384 = arith.addf %380, %383 : vector<8x128xf32>
    %c56 = arith.constant 56 : index
    %385 = memref.load %arg1[%c56] : memref<131xf32, #tpu.memory_space<smem>>
    %386 = vector.broadcast %385 : f32 to vector<8x128xf32>
    %387 = arith.mulf %386, %71 : vector<8x128xf32>
    %388 = arith.addf %384, %387 : vector<8x128xf32>
    %cst_35 = arith.constant 0.000000e+00 : f32
    %389 = vector.broadcast %cst_35 : f32 to vector<8x128xf32>
    %390 = arith.cmpf ogt, %388, %389 : vector<8x128xf32>
    %391 = math.exp %388 : vector<8x128xf32>
    %cst_36 = arith.constant 1.000000e+00 : f32
    %392 = vector.broadcast %cst_36 : f32 to vector<8x128xf32>
    %393 = arith.subf %391, %392 : vector<8x128xf32>
    %cst_37 = arith.constant 1.67326319 : f32
    %394 = vector.broadcast %cst_37 : f32 to vector<8x128xf32>
    %395 = arith.mulf %394, %393 : vector<8x128xf32>
    %396 = arith.select %390, %388, %395 : vector<8x128xi1>, vector<8x128xf32>
    %c100 = arith.constant 100 : index
    %397 = memref.load %arg1[%c100] : memref<131xf32, #tpu.memory_space<smem>>
    %398 = vector.broadcast %397 : f32 to vector<8x128xf32>
    %399 = arith.mulf %398, %396 : vector<8x128xf32>
    %400 = arith.addf %350, %399 : vector<8x128xf32>
    %c101 = arith.constant 101 : index
    %401 = memref.load %arg1[%c101] : memref<131xf32, #tpu.memory_space<smem>>
    %402 = vector.broadcast %401 : f32 to vector<8x128xf32>
    %403 = arith.mulf %402, %396 : vector<8x128xf32>
    %404 = arith.addf %354, %403 : vector<8x128xf32>
    %c102 = arith.constant 102 : index
    %405 = memref.load %arg1[%c102] : memref<131xf32, #tpu.memory_space<smem>>
    %406 = vector.broadcast %405 : f32 to vector<8x128xf32>
    %407 = arith.mulf %406, %396 : vector<8x128xf32>
    %408 = arith.addf %358, %407 : vector<8x128xf32>
    %c103 = arith.constant 103 : index
    %409 = memref.load %arg1[%c103] : memref<131xf32, #tpu.memory_space<smem>>
    %410 = vector.broadcast %409 : f32 to vector<8x128xf32>
    %411 = arith.mulf %410, %396 : vector<8x128xf32>
    %412 = arith.addf %362, %411 : vector<8x128xf32>
    %c104 = arith.constant 104 : index
    %413 = memref.load %arg1[%c104] : memref<131xf32, #tpu.memory_space<smem>>
    %414 = vector.broadcast %413 : f32 to vector<8x128xf32>
    %415 = arith.mulf %414, %396 : vector<8x128xf32>
    %416 = arith.addf %366, %415 : vector<8x128xf32>
    %c67 = arith.constant 67 : index
    %417 = memref.load %arg1[%c67] : memref<131xf32, #tpu.memory_space<smem>>
    %c17 = arith.constant 17 : index
    %418 = memref.load %arg1[%c17] : memref<131xf32, #tpu.memory_space<smem>>
    %419 = vector.broadcast %418 : f32 to vector<8x128xf32>
    %420 = arith.mulf %419, %27 : vector<8x128xf32>
    %421 = vector.broadcast %417 : f32 to vector<8x128xf32>
    %422 = arith.addf %421, %420 : vector<8x128xf32>
    %c27 = arith.constant 27 : index
    %423 = memref.load %arg1[%c27] : memref<131xf32, #tpu.memory_space<smem>>
    %424 = vector.broadcast %423 : f32 to vector<8x128xf32>
    %425 = arith.mulf %424, %38 : vector<8x128xf32>
    %426 = arith.addf %422, %425 : vector<8x128xf32>
    %c37 = arith.constant 37 : index
    %427 = memref.load %arg1[%c37] : memref<131xf32, #tpu.memory_space<smem>>
    %428 = vector.broadcast %427 : f32 to vector<8x128xf32>
    %429 = arith.mulf %428, %49 : vector<8x128xf32>
    %430 = arith.addf %426, %429 : vector<8x128xf32>
    %c47 = arith.constant 47 : index
    %431 = memref.load %arg1[%c47] : memref<131xf32, #tpu.memory_space<smem>>
    %432 = vector.broadcast %431 : f32 to vector<8x128xf32>
    %433 = arith.mulf %432, %60 : vector<8x128xf32>
    %434 = arith.addf %430, %433 : vector<8x128xf32>
    %c57 = arith.constant 57 : index
    %435 = memref.load %arg1[%c57] : memref<131xf32, #tpu.memory_space<smem>>
    %436 = vector.broadcast %435 : f32 to vector<8x128xf32>
    %437 = arith.mulf %436, %71 : vector<8x128xf32>
    %438 = arith.addf %434, %437 : vector<8x128xf32>
    %cst_38 = arith.constant 0.000000e+00 : f32
    %439 = vector.broadcast %cst_38 : f32 to vector<8x128xf32>
    %440 = arith.cmpf ogt, %438, %439 : vector<8x128xf32>
    %441 = math.exp %438 : vector<8x128xf32>
    %cst_39 = arith.constant 1.000000e+00 : f32
    %442 = vector.broadcast %cst_39 : f32 to vector<8x128xf32>
    %443 = arith.subf %441, %442 : vector<8x128xf32>
    %cst_40 = arith.constant 1.67326319 : f32
    %444 = vector.broadcast %cst_40 : f32 to vector<8x128xf32>
    %445 = arith.mulf %444, %443 : vector<8x128xf32>
    %446 = arith.select %440, %438, %445 : vector<8x128xi1>, vector<8x128xf32>
    %c105 = arith.constant 105 : index
    %447 = memref.load %arg1[%c105] : memref<131xf32, #tpu.memory_space<smem>>
    %448 = vector.broadcast %447 : f32 to vector<8x128xf32>
    %449 = arith.mulf %448, %446 : vector<8x128xf32>
    %450 = arith.addf %400, %449 : vector<8x128xf32>
    %c106 = arith.constant 106 : index
    %451 = memref.load %arg1[%c106] : memref<131xf32, #tpu.memory_space<smem>>
    %452 = vector.broadcast %451 : f32 to vector<8x128xf32>
    %453 = arith.mulf %452, %446 : vector<8x128xf32>
    %454 = arith.addf %404, %453 : vector<8x128xf32>
    %c107 = arith.constant 107 : index
    %455 = memref.load %arg1[%c107] : memref<131xf32, #tpu.memory_space<smem>>
    %456 = vector.broadcast %455 : f32 to vector<8x128xf32>
    %457 = arith.mulf %456, %446 : vector<8x128xf32>
    %458 = arith.addf %408, %457 : vector<8x128xf32>
    %c108 = arith.constant 108 : index
    %459 = memref.load %arg1[%c108] : memref<131xf32, #tpu.memory_space<smem>>
    %460 = vector.broadcast %459 : f32 to vector<8x128xf32>
    %461 = arith.mulf %460, %446 : vector<8x128xf32>
    %462 = arith.addf %412, %461 : vector<8x128xf32>
    %c109 = arith.constant 109 : index
    %463 = memref.load %arg1[%c109] : memref<131xf32, #tpu.memory_space<smem>>
    %464 = vector.broadcast %463 : f32 to vector<8x128xf32>
    %465 = arith.mulf %464, %446 : vector<8x128xf32>
    %466 = arith.addf %416, %465 : vector<8x128xf32>
    %c68 = arith.constant 68 : index
    %467 = memref.load %arg1[%c68] : memref<131xf32, #tpu.memory_space<smem>>
    %c18 = arith.constant 18 : index
    %468 = memref.load %arg1[%c18] : memref<131xf32, #tpu.memory_space<smem>>
    %469 = vector.broadcast %468 : f32 to vector<8x128xf32>
    %470 = arith.mulf %469, %27 : vector<8x128xf32>
    %471 = vector.broadcast %467 : f32 to vector<8x128xf32>
    %472 = arith.addf %471, %470 : vector<8x128xf32>
    %c28 = arith.constant 28 : index
    %473 = memref.load %arg1[%c28] : memref<131xf32, #tpu.memory_space<smem>>
    %474 = vector.broadcast %473 : f32 to vector<8x128xf32>
    %475 = arith.mulf %474, %38 : vector<8x128xf32>
    %476 = arith.addf %472, %475 : vector<8x128xf32>
    %c38 = arith.constant 38 : index
    %477 = memref.load %arg1[%c38] : memref<131xf32, #tpu.memory_space<smem>>
    %478 = vector.broadcast %477 : f32 to vector<8x128xf32>
    %479 = arith.mulf %478, %49 : vector<8x128xf32>
    %480 = arith.addf %476, %479 : vector<8x128xf32>
    %c48 = arith.constant 48 : index
    %481 = memref.load %arg1[%c48] : memref<131xf32, #tpu.memory_space<smem>>
    %482 = vector.broadcast %481 : f32 to vector<8x128xf32>
    %483 = arith.mulf %482, %60 : vector<8x128xf32>
    %484 = arith.addf %480, %483 : vector<8x128xf32>
    %c58 = arith.constant 58 : index
    %485 = memref.load %arg1[%c58] : memref<131xf32, #tpu.memory_space<smem>>
    %486 = vector.broadcast %485 : f32 to vector<8x128xf32>
    %487 = arith.mulf %486, %71 : vector<8x128xf32>
    %488 = arith.addf %484, %487 : vector<8x128xf32>
    %cst_41 = arith.constant 0.000000e+00 : f32
    %489 = vector.broadcast %cst_41 : f32 to vector<8x128xf32>
    %490 = arith.cmpf ogt, %488, %489 : vector<8x128xf32>
    %491 = math.exp %488 : vector<8x128xf32>
    %cst_42 = arith.constant 1.000000e+00 : f32
    %492 = vector.broadcast %cst_42 : f32 to vector<8x128xf32>
    %493 = arith.subf %491, %492 : vector<8x128xf32>
    %cst_43 = arith.constant 1.67326319 : f32
    %494 = vector.broadcast %cst_43 : f32 to vector<8x128xf32>
    %495 = arith.mulf %494, %493 : vector<8x128xf32>
    %496 = arith.select %490, %488, %495 : vector<8x128xi1>, vector<8x128xf32>
    %c110 = arith.constant 110 : index
    %497 = memref.load %arg1[%c110] : memref<131xf32, #tpu.memory_space<smem>>
    %498 = vector.broadcast %497 : f32 to vector<8x128xf32>
    %499 = arith.mulf %498, %496 : vector<8x128xf32>
    %500 = arith.addf %450, %499 : vector<8x128xf32>
    %c111 = arith.constant 111 : index
    %501 = memref.load %arg1[%c111] : memref<131xf32, #tpu.memory_space<smem>>
    %502 = vector.broadcast %501 : f32 to vector<8x128xf32>
    %503 = arith.mulf %502, %496 : vector<8x128xf32>
    %504 = arith.addf %454, %503 : vector<8x128xf32>
    %c112 = arith.constant 112 : index
    %505 = memref.load %arg1[%c112] : memref<131xf32, #tpu.memory_space<smem>>
    %506 = vector.broadcast %505 : f32 to vector<8x128xf32>
    %507 = arith.mulf %506, %496 : vector<8x128xf32>
    %508 = arith.addf %458, %507 : vector<8x128xf32>
    %c113 = arith.constant 113 : index
    %509 = memref.load %arg1[%c113] : memref<131xf32, #tpu.memory_space<smem>>
    %510 = vector.broadcast %509 : f32 to vector<8x128xf32>
    %511 = arith.mulf %510, %496 : vector<8x128xf32>
    %512 = arith.addf %462, %511 : vector<8x128xf32>
    %c114 = arith.constant 114 : index
    %513 = memref.load %arg1[%c114] : memref<131xf32, #tpu.memory_space<smem>>
    %514 = vector.broadcast %513 : f32 to vector<8x128xf32>
    %515 = arith.mulf %514, %496 : vector<8x128xf32>
    %516 = arith.addf %466, %515 : vector<8x128xf32>
    %c69 = arith.constant 69 : index
    %517 = memref.load %arg1[%c69] : memref<131xf32, #tpu.memory_space<smem>>
    %c19 = arith.constant 19 : index
    %518 = memref.load %arg1[%c19] : memref<131xf32, #tpu.memory_space<smem>>
    %519 = vector.broadcast %518 : f32 to vector<8x128xf32>
    %520 = arith.mulf %519, %27 : vector<8x128xf32>
    %521 = vector.broadcast %517 : f32 to vector<8x128xf32>
    %522 = arith.addf %521, %520 : vector<8x128xf32>
    %c29 = arith.constant 29 : index
    %523 = memref.load %arg1[%c29] : memref<131xf32, #tpu.memory_space<smem>>
    %524 = vector.broadcast %523 : f32 to vector<8x128xf32>
    %525 = arith.mulf %524, %38 : vector<8x128xf32>
    %526 = arith.addf %522, %525 : vector<8x128xf32>
    %c39 = arith.constant 39 : index
    %527 = memref.load %arg1[%c39] : memref<131xf32, #tpu.memory_space<smem>>
    %528 = vector.broadcast %527 : f32 to vector<8x128xf32>
    %529 = arith.mulf %528, %49 : vector<8x128xf32>
    %530 = arith.addf %526, %529 : vector<8x128xf32>
    %c49 = arith.constant 49 : index
    %531 = memref.load %arg1[%c49] : memref<131xf32, #tpu.memory_space<smem>>
    %532 = vector.broadcast %531 : f32 to vector<8x128xf32>
    %533 = arith.mulf %532, %60 : vector<8x128xf32>
    %534 = arith.addf %530, %533 : vector<8x128xf32>
    %c59 = arith.constant 59 : index
    %535 = memref.load %arg1[%c59] : memref<131xf32, #tpu.memory_space<smem>>
    %536 = vector.broadcast %535 : f32 to vector<8x128xf32>
    %537 = arith.mulf %536, %71 : vector<8x128xf32>
    %538 = arith.addf %534, %537 : vector<8x128xf32>
    %cst_44 = arith.constant 0.000000e+00 : f32
    %539 = vector.broadcast %cst_44 : f32 to vector<8x128xf32>
    %540 = arith.cmpf ogt, %538, %539 : vector<8x128xf32>
    %541 = math.exp %538 : vector<8x128xf32>
    %cst_45 = arith.constant 1.000000e+00 : f32
    %542 = vector.broadcast %cst_45 : f32 to vector<8x128xf32>
    %543 = arith.subf %541, %542 : vector<8x128xf32>
    %cst_46 = arith.constant 1.67326319 : f32
    %544 = vector.broadcast %cst_46 : f32 to vector<8x128xf32>
    %545 = arith.mulf %544, %543 : vector<8x128xf32>
    %546 = arith.select %540, %538, %545 : vector<8x128xi1>, vector<8x128xf32>
    %c115 = arith.constant 115 : index
    %547 = memref.load %arg1[%c115] : memref<131xf32, #tpu.memory_space<smem>>
    %548 = vector.broadcast %547 : f32 to vector<8x128xf32>
    %549 = arith.mulf %548, %546 : vector<8x128xf32>
    %550 = arith.addf %500, %549 : vector<8x128xf32>
    %c116 = arith.constant 116 : index
    %551 = memref.load %arg1[%c116] : memref<131xf32, #tpu.memory_space<smem>>
    %552 = vector.broadcast %551 : f32 to vector<8x128xf32>
    %553 = arith.mulf %552, %546 : vector<8x128xf32>
    %554 = arith.addf %504, %553 : vector<8x128xf32>
    %c117 = arith.constant 117 : index
    %555 = memref.load %arg1[%c117] : memref<131xf32, #tpu.memory_space<smem>>
    %556 = vector.broadcast %555 : f32 to vector<8x128xf32>
    %557 = arith.mulf %556, %546 : vector<8x128xf32>
    %558 = arith.addf %508, %557 : vector<8x128xf32>
    %c118 = arith.constant 118 : index
    %559 = memref.load %arg1[%c118] : memref<131xf32, #tpu.memory_space<smem>>
    %560 = vector.broadcast %559 : f32 to vector<8x128xf32>
    %561 = arith.mulf %560, %546 : vector<8x128xf32>
    %562 = arith.addf %512, %561 : vector<8x128xf32>
    %c119 = arith.constant 119 : index
    %563 = memref.load %arg1[%c119] : memref<131xf32, #tpu.memory_space<smem>>
    %564 = vector.broadcast %563 : f32 to vector<8x128xf32>
    %565 = arith.mulf %564, %546 : vector<8x128xf32>
    %566 = arith.addf %516, %565 : vector<8x128xf32>
    %c120 = arith.constant 120 : index
    %567 = memref.load %arg1[%c120] : memref<131xf32, #tpu.memory_space<smem>>
    %568 = vector.broadcast %567 : f32 to vector<8x128xf32>
    %569 = arith.addf %550, %568 : vector<8x128xf32>
    %cst_47 = arith.constant 0.000000e+00 : f32
    %570 = vector.broadcast %cst_47 : f32 to vector<8x128xf32>
    %571 = arith.cmpf ogt, %569, %570 : vector<8x128xf32>
    %572 = math.exp %569 : vector<8x128xf32>
    %cst_48 = arith.constant 1.000000e+00 : f32
    %573 = vector.broadcast %cst_48 : f32 to vector<8x128xf32>
    %574 = arith.subf %572, %573 : vector<8x128xf32>
    %cst_49 = arith.constant 1.67326319 : f32
    %575 = vector.broadcast %cst_49 : f32 to vector<8x128xf32>
    %576 = arith.mulf %575, %574 : vector<8x128xf32>
    %577 = arith.select %571, %569, %576 : vector<8x128xi1>, vector<8x128xf32>
    %c121 = arith.constant 121 : index
    %578 = memref.load %arg1[%c121] : memref<131xf32, #tpu.memory_space<smem>>
    %579 = vector.broadcast %578 : f32 to vector<8x128xf32>
    %580 = arith.addf %554, %579 : vector<8x128xf32>
    %cst_50 = arith.constant 0.000000e+00 : f32
    %581 = vector.broadcast %cst_50 : f32 to vector<8x128xf32>
    %582 = arith.cmpf ogt, %580, %581 : vector<8x128xf32>
    %583 = math.exp %580 : vector<8x128xf32>
    %cst_51 = arith.constant 1.000000e+00 : f32
    %584 = vector.broadcast %cst_51 : f32 to vector<8x128xf32>
    %585 = arith.subf %583, %584 : vector<8x128xf32>
    %cst_52 = arith.constant 1.67326319 : f32
    %586 = vector.broadcast %cst_52 : f32 to vector<8x128xf32>
    %587 = arith.mulf %586, %585 : vector<8x128xf32>
    %588 = arith.select %582, %580, %587 : vector<8x128xi1>, vector<8x128xf32>
    %c122 = arith.constant 122 : index
    %589 = memref.load %arg1[%c122] : memref<131xf32, #tpu.memory_space<smem>>
    %590 = vector.broadcast %589 : f32 to vector<8x128xf32>
    %591 = arith.addf %558, %590 : vector<8x128xf32>
    %cst_53 = arith.constant 0.000000e+00 : f32
    %592 = vector.broadcast %cst_53 : f32 to vector<8x128xf32>
    %593 = arith.cmpf ogt, %591, %592 : vector<8x128xf32>
    %594 = math.exp %591 : vector<8x128xf32>
    %cst_54 = arith.constant 1.000000e+00 : f32
    %595 = vector.broadcast %cst_54 : f32 to vector<8x128xf32>
    %596 = arith.subf %594, %595 : vector<8x128xf32>
    %cst_55 = arith.constant 1.67326319 : f32
    %597 = vector.broadcast %cst_55 : f32 to vector<8x128xf32>
    %598 = arith.mulf %597, %596 : vector<8x128xf32>
    %599 = arith.select %593, %591, %598 : vector<8x128xi1>, vector<8x128xf32>
    %c123 = arith.constant 123 : index
    %600 = memref.load %arg1[%c123] : memref<131xf32, #tpu.memory_space<smem>>
    %601 = vector.broadcast %600 : f32 to vector<8x128xf32>
    %602 = arith.addf %562, %601 : vector<8x128xf32>
    %cst_56 = arith.constant 0.000000e+00 : f32
    %603 = vector.broadcast %cst_56 : f32 to vector<8x128xf32>
    %604 = arith.cmpf ogt, %602, %603 : vector<8x128xf32>
    %605 = math.exp %602 : vector<8x128xf32>
    %cst_57 = arith.constant 1.000000e+00 : f32
    %606 = vector.broadcast %cst_57 : f32 to vector<8x128xf32>
    %607 = arith.subf %605, %606 : vector<8x128xf32>
    %cst_58 = arith.constant 1.67326319 : f32
    %608 = vector.broadcast %cst_58 : f32 to vector<8x128xf32>
    %609 = arith.mulf %608, %607 : vector<8x128xf32>
    %610 = arith.select %604, %602, %609 : vector<8x128xi1>, vector<8x128xf32>
    %c124 = arith.constant 124 : index
    %611 = memref.load %arg1[%c124] : memref<131xf32, #tpu.memory_space<smem>>
    %612 = vector.broadcast %611 : f32 to vector<8x128xf32>
    %613 = arith.addf %566, %612 : vector<8x128xf32>
    %cst_59 = arith.constant 0.000000e+00 : f32
    %614 = vector.broadcast %cst_59 : f32 to vector<8x128xf32>
    %615 = arith.cmpf ogt, %613, %614 : vector<8x128xf32>
    %616 = math.exp %613 : vector<8x128xf32>
    %cst_60 = arith.constant 1.000000e+00 : f32
    %617 = vector.broadcast %cst_60 : f32 to vector<8x128xf32>
    %618 = arith.subf %616, %617 : vector<8x128xf32>
    %cst_61 = arith.constant 1.67326319 : f32
    %619 = vector.broadcast %cst_61 : f32 to vector<8x128xf32>
    %620 = arith.mulf %619, %618 : vector<8x128xf32>
    %621 = arith.select %615, %613, %620 : vector<8x128xi1>, vector<8x128xf32>
    %c130 = arith.constant 130 : index
    %622 = memref.load %arg1[%c130] : memref<131xf32, #tpu.memory_space<smem>>
    %c125 = arith.constant 125 : index
    %623 = memref.load %arg1[%c125] : memref<131xf32, #tpu.memory_space<smem>>
    %624 = vector.broadcast %623 : f32 to vector<8x128xf32>
    %625 = arith.mulf %624, %577 : vector<8x128xf32>
    %626 = vector.broadcast %622 : f32 to vector<8x128xf32>
    %627 = arith.addf %626, %625 : vector<8x128xf32>
    %c126 = arith.constant 126 : index
    %628 = memref.load %arg1[%c126] : memref<131xf32, #tpu.memory_space<smem>>
    %629 = vector.broadcast %628 : f32 to vector<8x128xf32>
    %630 = arith.mulf %629, %588 : vector<8x128xf32>
    %631 = arith.addf %627, %630 : vector<8x128xf32>
    %c127 = arith.constant 127 : index
    %632 = memref.load %arg1[%c127] : memref<131xf32, #tpu.memory_space<smem>>
    %633 = vector.broadcast %632 : f32 to vector<8x128xf32>
    %634 = arith.mulf %633, %599 : vector<8x128xf32>
    %635 = arith.addf %631, %634 : vector<8x128xf32>
    %c128 = arith.constant 128 : index
    %636 = memref.load %arg1[%c128] : memref<131xf32, #tpu.memory_space<smem>>
    %637 = vector.broadcast %636 : f32 to vector<8x128xf32>
    %638 = arith.mulf %637, %610 : vector<8x128xf32>
    %639 = arith.addf %635, %638 : vector<8x128xf32>
    %c129 = arith.constant 129 : index
    %640 = memref.load %arg1[%c129] : memref<131xf32, #tpu.memory_space<smem>>
    %641 = vector.broadcast %640 : f32 to vector<8x128xf32>
    %642 = arith.mulf %641, %621 : vector<8x128xf32>
    %643 = arith.addf %639, %642 : vector<8x128xf32>
    %c0_62 = arith.constant 0 : index
    %c0_63 = arith.constant 0 : index
    %c0_64 = arith.constant 0 : index
    %644 = vector.load %arg3[%c0_62, %c0_63, %c0_64] : memref<1x8x128xf32, #tpu.memory_space<vmem>>, vector<1x8x128xf32>
    %645 = vector.shape_cast %644 : vector<1x8x128xf32> to vector<8x128xf32>
    %646 = vector.shape_cast %643 : vector<8x128xf32> to vector<1x8x128xf32>
    tpu.vector_store %arg3[%c0_62, %c0_63, %c0_64], %646 {strides = array<i32>} : memref<1x8x128xf32, #tpu.memory_space<vmem>>, vector<1x8x128xf32>,
    return
  }
  func.func @transform_0(%arg0: i32) -> i32 {
    %c0_i32 = arith.constant 0 : i32
    %c0_i32_0 = arith.constant 0 : i32
    return %c0_i32 : i32
  }
  func.func @transform_1(%arg0: i32) -> (i32, i32, i32) {
    %c0_i32 = arith.constant 0 : i32
    %c0_i32_0 = arith.constant 0 : i32
    %c0_i32_1 = arith.constant 0 : i32
    return %c0_i32, %arg0, %c0_i32_0 : i32, i32, i32
  }
  func.func @transform_2(%arg0: i32) -> (i32, i32, i32) {
    %c0_i32 = arith.constant 0 : i32
    %c0_i32_0 = arith.constant 0 : i32
    %c0_i32_1 = arith.constant 0 : i32
    return %c0_i32, %arg0, %c0_i32_0 : i32, i32, i32
  }
}

</mosaic_0001>

<llo_original>
// kernel: tpu_custom_call.1
$region0: #{tpu_custom_call.1}
  #allocation0 [shape = 'u32[]', space=smem, size = 0x4, offset = 0x4, fixed_abs, tag = 'smem constant byte address 0x4 - core index']
  #allocation1 [shape = 'u32[144,128]{1,0:T(1,128)}', space=vmem, size = 0x12000, scoped, tag = 'internal scratch']
  %s0 = inlined_call_operand.hbm [shape: f32[131], index: 0, kind: input, shape index: {}]
  %s1 = inlined_call_operand.hbm [shape: f32[1,8,128], index: 1, kind: input, shape index: {}]
  %s2 = inlined_call_operand.hbm [shape: f32[1,8,128], index: 2, kind: output, shape index: {}]
  %s3 = sld [smem:[#allocation0]]
  $region26: #{tpu_custom_call.1} parent=0
    _
  %s5 = ssub.s32 1, %s3
  %s6 = scalar_select 0, %s5, %s3
  $region1: #{tpu_custom_call.1} parent=0
    #allocation2 [shape = 'u8[1024]{0}', space=smem, size = 0x400, scoped, tag = 'input window, operand 0, single buffered']
    #allocation3 [shape = 's32[1]{0}', space=sflag, size = 0x4, scoped, tag = 'scoped memory for tpu_custom_call.1']
    #allocation4 [shape = 's32[1]{0}', space=sflag, size = 0x4, scoped, tag = 'scoped memory for tpu_custom_call.1']
    #allocation5 [shape = 's32[1]{0}', space=sflag, size = 0x4, scoped, tag = 'scoped memory for tpu_custom_call.1']
    #allocation6 [shape = 'u8[4096]{0}', space=vmem, size = 0x1000, scoped, tag = 'input window, operand 1, single buffered']
    #allocation7 [shape = 'u8[4096]{0}', space=vmem, size = 0x1000, scoped, tag = 'output window, operand 0, single buffered']
    %7 = vsyncpa [#allocation5], 0
    %8 = vsyncpa [#allocation3], 0
    %9 = vsyncpa [#allocation4], 0
    // Predicated region
    $region2: #{tpu_custom_call.1} parent=1 // pred_check
      _
    $region3: #{tpu_custom_call.1} parent=1 // pred_check_branch
      %11 = sbr.rel (0) target = $region5
    $region4: #{tpu_custom_call.1} parent=1 // pred_region
      %s13 = ssub.s32 32, 32
      %14 = vsyncadd [#allocation5], %s13
      %17 = dma.hbm_to_smem %s0, 32, [#allocation2], [#allocation5]
    $region5: #{tpu_custom_call.1} parent=1 // pred_fallthru
      _
    // Predicated region
    $region6: #{tpu_custom_call.1} parent=1 // pred_check
      _
    $region7: #{tpu_custom_call.1} parent=1 // pred_check_branch
      %19 = sbr.rel (0) target = $region9
    $region8: #{tpu_custom_call.1} parent=1 // pred_region
      %s21 = ssub.s32 128, 128
      %22 = vsyncadd [#allocation3], %s21
      %s24 = sshll.u32 [#allocation6], 4
      %s25 = int_to_ptr.vmem [resolvable:$true] %s24
      %27 = dma.hbm_to_vmem [thread:$0]  %s1, 128, %s25, [#allocation3]
    $region9: #{tpu_custom_call.1} parent=1 // pred_fallthru
      _
    // Predicated region
    $region10: #{tpu_custom_call.1} parent=1 // pred_check
      _
    $region11: #{tpu_custom_call.1} parent=1 // pred_check_branch
      %29 = sbr.rel (0) target = $region13
    $region12: #{tpu_custom_call.1} parent=1 // pred_region
      %30 = dma.done [#allocation5], 32
    $region13: #{tpu_custom_call.1} parent=1 // pred_fallthru
      _
    // Predicated region
    $region14: #{tpu_custom_call.1} parent=1 // pred_check
      _
    $region15: #{tpu_custom_call.1} parent=1 // pred_check_branch
      %32 = sbr.rel (0) target = $region17
    $region16: #{tpu_custom_call.1} parent=1 // pred_region
      %33 = dma.done [#allocation3], 128
    $region17: #{tpu_custom_call.1} parent=1 // pred_fallthru
      _
    %34 = sfence
    %v35 = vld [vmem:[#allocation6] sm:$0xff]
    %s36 = sld [smem:[#allocation2]]
    %v37 = vstv %s36
    %v38 = vmul.f32 %v37, %v35
    %s39 = sld [smem:[#allocation2 + $0x1]]
    %v40 = vstv %s39
    %v41 = vmul.f32 %v40, %v35
    %s42 = sld [smem:[#allocation2 + $0x2]]
    %v43 = vstv %s42
    %v44 = vmul.f32 %v43, %v35
    %s45 = sld [smem:[#allocation2 + $0x3]]
    %v46 = vstv %s45
    %v47 = vmul.f32 %v46, %v35
    %s48 = sld [smem:[#allocation2 + $0x4]]
    %v49 = vstv %s48
    %v50 = vmul.f32 %v49, %v35
    %s51 = sld [smem:[#allocation2 + $0x5]]
    %v52 = vstv %s51
    %v53 = vadd.f32 %v38, %v52
    %vm54 = vcmp.gt.f32.partialorder %v53, 0.0
    %v55 = vmul.f32 %v53, 1.442695
    %v56 = vpow.pop %v55
    %v57 = vsub.f32 %v56, 1.0
    %v58 = vmul.f32 %v57, 1.6732632
    %v59 = vsel %vm54, %v53, %v58
    %s60 = sld [smem:[#allocation2 + $0x6]]
    %v61 = vstv %s60
    %v62 = vadd.f32 %v41, %v61
    %vm63 = vcmp.gt.f32.partialorder %v62, 0.0
    %v64 = vmul.f32 %v62, 1.442695
    %v65 = vpow.pop %v64
    %v66 = vsub.f32 %v65, 1.0
    %v67 = vmul.f32 %v66, 1.6732632
    %v68 = vsel %vm63, %v62, %v67
    %s69 = sld [smem:[#allocation2 + $0x7]]
    %v70 = vstv %s69
    %v71 = vadd.f32 %v44, %v70
    %vm72 = vcmp.gt.f32.partialorder %v71, 0.0
    %v73 = vmul.f32 %v71, 1.442695
    %v74 = vpow.pop %v73
    %v75 = vsub.f32 %v74, 1.0
    %v76 = vmul.f32 %v75, 1.6732632
    %v77 = vsel %vm72, %v71, %v76
    %s78 = sld [smem:[#allocation2 + $0x8]]
    %v79 = vstv %s78
    %v80 = vadd.f32 %v47, %v79
    %vm81 = vcmp.gt.f32.partialorder %v80, 0.0
    %v82 = vmul.f32 %v80, 1.442695
    %v83 = vpow.pop %v82
    %v84 = vsub.f32 %v83, 1.0
    %v85 = vmul.f32 %v84, 1.6732632
    %v86 = vsel %vm81, %v80, %v85
    %s87 = sld [smem:[#allocation2 + $0x9]]
    %v88 = vstv %s87
    %v89 = vadd.f32 %v50, %v88
    %vm90 = vcmp.gt.f32.partialorder %v89, 0.0
    %v91 = vmul.f32 %v89, 1.442695
    %v92 = vpow.pop %v91
    %v93 = vsub.f32 %v92, 1.0
    %v94 = vmul.f32 %v93, 1.6732632
    %v95 = vsel %vm90, %v89, %v94
    %s96 = sld [smem:[#allocation2 + $0x3c]]
    %s97 = sld [smem:[#allocation2 + $0xa]]
    %v98 = vstv %s97
    %v99 = vmul.f32 %v98, %v59
    %v100 = vstv %s96
    %v101 = vadd.f32 %v100, %v99
    %s102 = sld [smem:[#allocation2 + $0x14]]
    %v103 = vstv %s102
    %v104 = vmul.f32 %v103, %v68
    %v105 = vadd.f32 %v101, %v104
    %s106 = sld [smem:[#allocation2 + $0x1e]]
    %v107 = vstv %s106
    %v108 = vmul.f32 %v107, %v77
    %v109 = vadd.f32 %v105, %v108
    %s110 = sld [smem:[#allocation2 + $0x28]]
    %v111 = vstv %s110
    %v112 = vmul.f32 %v111, %v86
    %v113 = vadd.f32 %v109, %v112
    %s114 = sld [smem:[#allocation2 + $0x32]]
    %v115 = vstv %s114
    %v116 = vmul.f32 %v115, %v95
    %v117 = vadd.f32 %v113, %v116
    %vm118 = vcmp.gt.f32.partialorder %v117, 0.0
    %v119 = vmul.f32 %v117, 1.442695
    %v120 = vpow.pop %v119
    %v121 = vsub.f32 %v120, 1.0
    %v122 = vmul.f32 %v121, 1.6732632
    %v123 = vsel %vm118, %v117, %v122
    %s124 = sld [smem:[#allocation2 + $0x46]]
    %v125 = vstv %s124
    %v126 = vmul.f32 %v125, %v123
    %s127 = sld [smem:[#allocation2 + $0x47]]
    %v128 = vstv %s127
    %v129 = vmul.f32 %v128, %v123
    %s130 = sld [smem:[#allocation2 + $0x48]]
    %v131 = vstv %s130
    %v132 = vmul.f32 %v131, %v123
    %s133 = sld [smem:[#allocation2 + $0x49]]
    %v134 = vstv %s133
    %v135 = vmul.f32 %v134, %v123
    %s136 = sld [smem:[#allocation2 + $0x4a]]
    %v137 = vstv %s136
    %v138 = vmul.f32 %v137, %v123
    %s139 = sld [smem:[#allocation2 + $0x3d]]
    %s140 = sld [smem:[#allocation2 + $0xb]]
    %v141 = vstv %s140
    %v142 = vmul.f32 %v141, %v59
    %v143 = vstv %s139
    %v144 = vadd.f32 %v143, %v142
    %s145 = sld [smem:[#allocation2 + $0x15]]
    %v146 = vstv %s145
    %v147 = vmul.f32 %v146, %v68
    %v148 = vadd.f32 %v144, %v147
    %s149 = sld [smem:[#allocation2 + $0x1f]]
    %v150 = vstv %s149
    %v151 = vmul.f32 %v150, %v77
    %v152 = vadd.f32 %v148, %v151
    %s153 = sld [smem:[#allocation2 + $0x29]]
    %v154 = vstv %s153
    %v155 = vmul.f32 %v154, %v86
    %v156 = vadd.f32 %v152, %v155
    %s157 = sld [smem:[#allocation2 + $0x33]]
    %v158 = vstv %s157
    %v159 = vmul.f32 %v158, %v95
    %v160 = vadd.f32 %v156, %v159
    %vm161 = vcmp.gt.f32.partialorder %v160, 0.0
    %v162 = vmul.f32 %v160, 1.442695
    %v163 = vpow.pop %v162
    %v164 = vsub.f32 %v163, 1.0
    %v165 = vmul.f32 %v164, 1.6732632
    %v166 = vsel %vm161, %v160, %v165
    %s167 = sld [smem:[#allocation2 + $0x4b]]
    %v168 = vstv %s167
    %v169 = vmul.f32 %v168, %v166
    %v170 = vadd.f32 %v126, %v169
    %s171 = sld [smem:[#allocation2 + $0x4c]]
    %v172 = vstv %s171
    %v173 = vmul.f32 %v172, %v166
    %v174 = vadd.f32 %v129, %v173
    %s175 = sld [smem:[#allocation2 + $0x4d]]
    %v176 = vstv %s175
    %v177 = vmul.f32 %v176, %v166
    %v178 = vadd.f32 %v132, %v177
    %s179 = sld [smem:[#allocation2 + $0x4e]]
    %v180 = vstv %s179
    %v181 = vmul.f32 %v180, %v166
    %v182 = vadd.f32 %v135, %v181
    %s183 = sld [smem:[#allocation2 + $0x4f]]
    %v184 = vstv %s183
    %v185 = vmul.f32 %v184, %v166
    %v186 = vadd.f32 %v138, %v185
    %s187 = sld [smem:[#allocation2 + $0x3e]]
    %s188 = sld [smem:[#allocation2 + $0xc]]
    %v189 = vstv %s188
    %v190 = vmul.f32 %v189, %v59
    %v191 = vstv %s187
    %v192 = vadd.f32 %v191, %v190
    %s193 = sld [smem:[#allocation2 + $0x16]]
    %v194 = vstv %s193
    %v195 = vmul.f32 %v194, %v68
    %v196 = vadd.f32 %v192, %v195
    %s197 = sld [smem:[#allocation2 + $0x20]]
    %v198 = vstv %s197
    %v199 = vmul.f32 %v198, %v77
    %v200 = vadd.f32 %v196, %v199
    %s201 = sld [smem:[#allocation2 + $0x2a]]
    %v202 = vstv %s201
    %v203 = vmul.f32 %v202, %v86
    %v204 = vadd.f32 %v200, %v203
    %s205 = sld [smem:[#allocation2 + $0x34]]
    %v206 = vstv %s205
    %v207 = vmul.f32 %v206, %v95
    %v208 = vadd.f32 %v204, %v207
    %vm209 = vcmp.gt.f32.partialorder %v208, 0.0
    %v210 = vmul.f32 %v208, 1.442695
    %v211 = vpow.pop %v210
    %v212 = vsub.f32 %v211, 1.0
    %v213 = vmul.f32 %v212, 1.6732632
    %v214 = vsel %vm209, %v208, %v213
    %s215 = sld [smem:[#allocation2 + $0x50]]
    %v216 = vstv %s215
    %v217 = vmul.f32 %v216, %v214
    %v218 = vadd.f32 %v170, %v217
    %s219 = sld [smem:[#allocation2 + $0x51]]
    %v220 = vstv %s219
    %v221 = vmul.f32 %v220, %v214
    %v222 = vadd.f32 %v174, %v221
    %s223 = sld [smem:[#allocation2 + $0x52]]
    %v224 = vstv %s223
    %v225 = vmul.f32 %v224, %v214
    %v226 = vadd.f32 %v178, %v225
    %s227 = sld [smem:[#allocation2 + $0x53]]
    %v228 = vstv %s227
    %v229 = vmul.f32 %v228, %v214
    %v230 = vadd.f32 %v182, %v229
    %s231 = sld [smem:[#allocation2 + $0x54]]
    %v232 = vstv %s231
    %v233 = vmul.f32 %v232, %v214
    %v234 = vadd.f32 %v186, %v233
    %s235 = sld [smem:[#allocation2 + $0x3f]]
    %s236 = sld [smem:[#allocation2 + $0xd]]
    %v237 = vstv %s236
    %v238 = vmul.f32 %v237, %v59
    %v239 = vstv %s235
    %v240 = vadd.f32 %v239, %v238
    %s241 = sld [smem:[#allocation2 + $0x17]]
    %v242 = vstv %s241
    %v243 = vmul.f32 %v242, %v68
    %v244 = vadd.f32 %v240, %v243
    %s245 = sld [smem:[#allocation2 + $0x21]]
    %v246 = vstv %s245
    %v247 = vmul.f32 %v246, %v77
    %v248 = vadd.f32 %v244, %v247
    %s249 = sld [smem:[#allocation2 + $0x2b]]
    %v250 = vstv %s249
    %v251 = vmul.f32 %v250, %v86
    %v252 = vadd.f32 %v248, %v251
    %s253 = sld [smem:[#allocation2 + $0x35]]
    %v254 = vstv %s253
    %v255 = vmul.f32 %v254, %v95
    %v256 = vadd.f32 %v252, %v255
    %vm257 = vcmp.gt.f32.partialorder %v256, 0.0
    %v258 = vmul.f32 %v256, 1.442695
    %v259 = vpow.pop %v258
    %v260 = vsub.f32 %v259, 1.0
    %v261 = vmul.f32 %v260, 1.6732632
    %v262 = vsel %vm257, %v256, %v261
    %s263 = sld [smem:[#allocation2 + $0x55]]
    %v264 = vstv %s263
    %v265 = vmul.f32 %v264, %v262
    %v266 = vadd.f32 %v218, %v265
    %s267 = sld [smem:[#allocation2 + $0x56]]
    %v268 = vstv %s267
    %v269 = vmul.f32 %v268, %v262
    %v270 = vadd.f32 %v222, %v269
    %s271 = sld [smem:[#allocation2 + $0x57]]
    %v272 = vstv %s271
    %v273 = vmul.f32 %v272, %v262
    %v274 = vadd.f32 %v226, %v273
    %s275 = sld [smem:[#allocation2 + $0x58]]
    %v276 = vstv %s275
    %v277 = vmul.f32 %v276, %v262
    %v278 = vadd.f32 %v230, %v277
    %s279 = sld [smem:[#allocation2 + $0x59]]
    %v280 = vstv %s279
    %v281 = vmul.f32 %v280, %v262
    %v282 = vadd.f32 %v234, %v281
    %s283 = sld [smem:[#allocation2 + $0x40]]
    %s284 = sld [smem:[#allocation2 + $0xe]]
    %v285 = vstv %s284
    %v286 = vmul.f32 %v285, %v59
    %v287 = vstv %s283
    %v288 = vadd.f32 %v287, %v286
    %s289 = sld [smem:[#allocation2 + $0x18]]
    %v290 = vstv %s289
    %v291 = vmul.f32 %v290, %v68
    %v292 = vadd.f32 %v288, %v291
    %s293 = sld [smem:[#allocation2 + $0x22]]
    %v294 = vstv %s293
    %v295 = vmul.f32 %v294, %v77
    %v296 = vadd.f32 %v292, %v295
    %s297 = sld [smem:[#allocation2 + $0x2c]]
    %v298 = vstv %s297
    %v299 = vmul.f32 %v298, %v86
    %v300 = vadd.f32 %v296, %v299
    %s301 = sld [smem:[#allocation2 + $0x36]]
    %v302 = vstv %s301
    %v303 = vmul.f32 %v302, %v95
    %v304 = vadd.f32 %v300, %v303
    %vm305 = vcmp.gt.f32.partialorder %v304, 0.0
    %v306 = vmul.f32 %v304, 1.442695
    %v307 = vpow.pop %v306
    %v308 = vsub.f32 %v307, 1.0
    %v309 = vmul.f32 %v308, 1.6732632
    %v310 = vsel %vm305, %v304, %v309
    %s311 = sld [smem:[#allocation2 + $0x5a]]
    %v312 = vstv %s311
    %v313 = vmul.f32 %v312, %v310
    %v314 = vadd.f32 %v266, %v313
    %s315 = sld [smem:[#allocation2 + $0x5b]]
    %v316 = vstv %s315
    %v317 = vmul.f32 %v316, %v310
    %v318 = vadd.f32 %v270, %v317
    %s319 = sld [smem:[#allocation2 + $0x5c]]
    %v320 = vstv %s319
    %v321 = vmul.f32 %v320, %v310
    %v322 = vadd.f32 %v274, %v321
    %s323 = sld [smem:[#allocation2 + $0x5d]]
    %v324 = vstv %s323
    %v325 = vmul.f32 %v324, %v310
    %v326 = vadd.f32 %v278, %v325
    %s327 = sld [smem:[#allocation2 + $0x5e]]
    %v328 = vstv %s327
    %v329 = vmul.f32 %v328, %v310
    %v330 = vadd.f32 %v282, %v329
    %s331 = sld [smem:[#allocation2 + $0x41]]
    %s332 = sld [smem:[#allocation2 + $0xf]]
    %v333 = vstv %s332
    %v334 = vmul.f32 %v333, %v59
    %v335 = vstv %s331
    %v336 = vadd.f32 %v335, %v334
    %s337 = sld [smem:[#allocation2 + $0x19]]
    %v338 = vstv %s337
    %v339 = vmul.f32 %v338, %v68
    %v340 = vadd.f32 %v336, %v339
    %s341 = sld [smem:[#allocation2 + $0x23]]
    %v342 = vstv %s341
    %v343 = vmul.f32 %v342, %v77
    %v344 = vadd.f32 %v340, %v343
    %s345 = sld [smem:[#allocation2 + $0x2d]]
    %v346 = vstv %s345
    %v347 = vmul.f32 %v346, %v86
    %v348 = vadd.f32 %v344, %v347
    %s349 = sld [smem:[#allocation2 + $0x37]]
    %v350 = vstv %s349
    %v351 = vmul.f32 %v350, %v95
    %v352 = vadd.f32 %v348, %v351
    %vm353 = vcmp.gt.f32.partialorder %v352, 0.0
    %v354 = vmul.f32 %v352, 1.442695
    %v355 = vpow.pop %v354
    %v356 = vsub.f32 %v355, 1.0
    %v357 = vmul.f32 %v356, 1.6732632
    %v358 = vsel %vm353, %v352, %v357
    %s359 = sld [smem:[#allocation2 + $0x5f]]
    %v360 = vstv %s359
    %v361 = vmul.f32 %v360, %v358
    %v362 = vadd.f32 %v314, %v361
    %s363 = sld [smem:[#allocation2 + $0x60]]
    %v364 = vstv %s363
    %v365 = vmul.f32 %v364, %v358
    %v366 = vadd.f32 %v318, %v365
    %s367 = sld [smem:[#allocation2 + $0x61]]
    %v368 = vstv %s367
    %v369 = vmul.f32 %v368, %v358
    %v370 = vadd.f32 %v322, %v369
    %s371 = sld [smem:[#allocation2 + $0x62]]
    %v372 = vstv %s371
    %v373 = vmul.f32 %v372, %v358
    %v374 = vadd.f32 %v326, %v373
    %s375 = sld [smem:[#allocation2 + $0x63]]
    %v376 = vstv %s375
    %v377 = vmul.f32 %v376, %v358
    %v378 = vadd.f32 %v330, %v377
    %s379 = sld [smem:[#allocation2 + $0x42]]
    %s380 = sld [smem:[#allocation2 + $0x10]]
    %v381 = vstv %s380
    %v382 = vmul.f32 %v381, %v59
    %v383 = vstv %s379
    %v384 = vadd.f32 %v383, %v382
    %s385 = sld [smem:[#allocation2 + $0x1a]]
    %v386 = vstv %s385
    %v387 = vmul.f32 %v386, %v68
    %v388 = vadd.f32 %v384, %v387
    %s389 = sld [smem:[#allocation2 + $0x24]]
    %v390 = vstv %s389
    %v391 = vmul.f32 %v390, %v77
    %v392 = vadd.f32 %v388, %v391
    %s393 = sld [smem:[#allocation2 + $0x2e]]
    %v394 = vstv %s393
    %v395 = vmul.f32 %v394, %v86
    %v396 = vadd.f32 %v392, %v395
    %s397 = sld [smem:[#allocation2 + $0x38]]
    %v398 = vstv %s397
    %v399 = vmul.f32 %v398, %v95
    %v400 = vadd.f32 %v396, %v399
    %vm401 = vcmp.gt.f32.partialorder %v400, 0.0
    %v402 = vmul.f32 %v400, 1.442695
    %v403 = vpow.pop %v402
    %v404 = vsub.f32 %v403, 1.0
    %v405 = vmul.f32 %v404, 1.6732632
    %v406 = vsel %vm401, %v400, %v405
    %s407 = sld [smem:[#allocation2 + $0x64]]
    %v408 = vstv %s407
    %v409 = vmul.f32 %v408, %v406
    %v410 = vadd.f32 %v362, %v409
    %s411 = sld [smem:[#allocation2 + $0x65]]
    %v412 = vstv %s411
    %v413 = vmul.f32 %v412, %v406
    %v414 = vadd.f32 %v366, %v413
    %s415 = sld [smem:[#allocation2 + $0x66]]
    %v416 = vstv %s415
    %v417 = vmul.f32 %v416, %v406
    %v418 = vadd.f32 %v370, %v417
    %s419 = sld [smem:[#allocation2 + $0x67]]
    %v420 = vstv %s419
    %v421 = vmul.f32 %v420, %v406
    %v422 = vadd.f32 %v374, %v421
    %s423 = sld [smem:[#allocation2 + $0x68]]
    %v424 = vstv %s423
    %v425 = vmul.f32 %v424, %v406
    %v426 = vadd.f32 %v378, %v425
    %s427 = sld [smem:[#allocation2 + $0x43]]
    %s428 = sld [smem:[#allocation2 + $0x11]]
    %v429 = vstv %s428
    %v430 = vmul.f32 %v429, %v59
    %v431 = vstv %s427
    %v432 = vadd.f32 %v431, %v430
    %s433 = sld [smem:[#allocation2 + $0x1b]]
    %v434 = vstv %s433
    %v435 = vmul.f32 %v434, %v68
    %v436 = vadd.f32 %v432, %v435
    %s437 = sld [smem:[#allocation2 + $0x25]]
    %v438 = vstv %s437
    %v439 = vmul.f32 %v438, %v77
    %v440 = vadd.f32 %v436, %v439
    %s441 = sld [smem:[#allocation2 + $0x2f]]
    %v442 = vstv %s441
    %v443 = vmul.f32 %v442, %v86
    %v444 = vadd.f32 %v440, %v443
    %s445 = sld [smem:[#allocation2 + $0x39]]
    %v446 = vstv %s445
    %v447 = vmul.f32 %v446, %v95
    %v448 = vadd.f32 %v444, %v447
    %vm449 = vcmp.gt.f32.partialorder %v448, 0.0
    %v450 = vmul.f32 %v448, 1.442695
    %v451 = vpow.pop %v450
    %v452 = vsub.f32 %v451, 1.0
    %v453 = vmul.f32 %v452, 1.6732632
    %v454 = vsel %vm449, %v448, %v453
    %s455 = sld [smem:[#allocation2 + $0x69]]
    %v456 = vstv %s455
    %v457 = vmul.f32 %v456, %v454
    %v458 = vadd.f32 %v410, %v457
    %s459 = sld [smem:[#allocation2 + $0x6a]]
    %v460 = vstv %s459
    %v461 = vmul.f32 %v460, %v454
    %v462 = vadd.f32 %v414, %v461
    %s463 = sld [smem:[#allocation2 + $0x6b]]
    %v464 = vstv %s463
    %v465 = vmul.f32 %v464, %v454
    %v466 = vadd.f32 %v418, %v465
    %s467 = sld [smem:[#allocation2 + $0x6c]]
    %v468 = vstv %s467
    %v469 = vmul.f32 %v468, %v454
    %v470 = vadd.f32 %v422, %v469
    %s471 = sld [smem:[#allocation2 + $0x6d]]
    %v472 = vstv %s471
    %v473 = vmul.f32 %v472, %v454
    %v474 = vadd.f32 %v426, %v473
    %s475 = sld [smem:[#allocation2 + $0x44]]
    %s476 = sld [smem:[#allocation2 + $0x12]]
    %v477 = vstv %s476
    %v478 = vmul.f32 %v477, %v59
    %v479 = vstv %s475
    %v480 = vadd.f32 %v479, %v478
    %s481 = sld [smem:[#allocation2 + $0x1c]]
    %v482 = vstv %s481
    %v483 = vmul.f32 %v482, %v68
    %v484 = vadd.f32 %v480, %v483
    %s485 = sld [smem:[#allocation2 + $0x26]]
    %v486 = vstv %s485
    %v487 = vmul.f32 %v486, %v77
    %v488 = vadd.f32 %v484, %v487
    %s489 = sld [smem:[#allocation2 + $0x30]]
    %v490 = vstv %s489
    %v491 = vmul.f32 %v490, %v86
    %v492 = vadd.f32 %v488, %v491
    %s493 = sld [smem:[#allocation2 + $0x3a]]
    %v494 = vstv %s493
    %v495 = vmul.f32 %v494, %v95
    %v496 = vadd.f32 %v492, %v495
    %vm497 = vcmp.gt.f32.partialorder %v496, 0.0
    %v498 = vmul.f32 %v496, 1.442695
    %v499 = vpow.pop %v498
    %v500 = vsub.f32 %v499, 1.0
    %v501 = vmul.f32 %v500, 1.6732632
    %v502 = vsel %vm497, %v496, %v501
    %s503 = sld [smem:[#allocation2 + $0x6e]]
    %v504 = vstv %s503
    %v505 = vmul.f32 %v504, %v502
    %v506 = vadd.f32 %v458, %v505
    %s507 = sld [smem:[#allocation2 + $0x6f]]
    %v508 = vstv %s507
    %v509 = vmul.f32 %v508, %v502
    %v510 = vadd.f32 %v462, %v509
    %s511 = sld [smem:[#allocation2 + $0x70]]
    %v512 = vstv %s511
    %v513 = vmul.f32 %v512, %v502
    %v514 = vadd.f32 %v466, %v513
    %s515 = sld [smem:[#allocation2 + $0x71]]
    %v516 = vstv %s515
    %v517 = vmul.f32 %v516, %v502
    %v518 = vadd.f32 %v470, %v517
    %s519 = sld [smem:[#allocation2 + $0x72]]
    %v520 = vstv %s519
    %v521 = vmul.f32 %v520, %v502
    %v522 = vadd.f32 %v474, %v521
    %s523 = sld [smem:[#allocation2 + $0x45]]
    %s524 = sld [smem:[#allocation2 + $0x13]]
    %v525 = vstv %s524
    %v526 = vmul.f32 %v525, %v59
    %v527 = vstv %s523
    %v528 = vadd.f32 %v527, %v526
    %s529 = sld [smem:[#allocation2 + $0x1d]]
    %v530 = vstv %s529
    %v531 = vmul.f32 %v530, %v68
    %v532 = vadd.f32 %v528, %v531
    %s533 = sld [smem:[#allocation2 + $0x27]]
    %v534 = vstv %s533
    %v535 = vmul.f32 %v534, %v77
    %v536 = vadd.f32 %v532, %v535
    %s537 = sld [smem:[#allocation2 + $0x31]]
    %v538 = vstv %s537
    %v539 = vmul.f32 %v538, %v86
    %v540 = vadd.f32 %v536, %v539
    %s541 = sld [smem:[#allocation2 + $0x3b]]
    %v542 = vstv %s541
    %v543 = vmul.f32 %v542, %v95
    %v544 = vadd.f32 %v540, %v543
    %vm545 = vcmp.gt.f32.partialorder %v544, 0.0
    %v546 = vmul.f32 %v544, 1.442695
    %v547 = vpow.pop %v546
    %v548 = vsub.f32 %v547, 1.0
    %v549 = vmul.f32 %v548, 1.6732632
    %v550 = vsel %vm545, %v544, %v549
    %s551 = sld [smem:[#allocation2 + $0x73]]
    %v552 = vstv %s551
    %v553 = vmul.f32 %v552, %v550
    %v554 = vadd.f32 %v506, %v553
    %s555 = sld [smem:[#allocation2 + $0x74]]
    %v556 = vstv %s555
    %v557 = vmul.f32 %v556, %v550
    %v558 = vadd.f32 %v510, %v557
    %s559 = sld [smem:[#allocation2 + $0x75]]
    %v560 = vstv %s559
    %v561 = vmul.f32 %v560, %v550
    %v562 = vadd.f32 %v514, %v561
    %s563 = sld [smem:[#allocation2 + $0x76]]
    %v564 = vstv %s563
    %v565 = vmul.f32 %v564, %v550
    %v566 = vadd.f32 %v518, %v565
    %s567 = sld [smem:[#allocation2 + $0x77]]
    %v568 = vstv %s567
    %v569 = vmul.f32 %v568, %v550
    %v570 = vadd.f32 %v522, %v569
    %s571 = sld [smem:[#allocation2 + $0x78]]
    %v572 = vstv %s571
    %v573 = vadd.f32 %v554, %v572
    %vm574 = vcmp.gt.f32.partialorder %v573, 0.0
    %v575 = vmul.f32 %v573, 1.442695
    %v576 = vpow.pop %v575
    %v577 = vsub.f32 %v576, 1.0
    %v578 = vmul.f32 %v577, 1.6732632
    %v579 = vsel %vm574, %v573, %v578
    %s580 = sld [smem:[#allocation2 + $0x79]]
    %v581 = vstv %s580
    %v582 = vadd.f32 %v558, %v581
    %vm583 = vcmp.gt.f32.partialorder %v582, 0.0
    %v584 = vmul.f32 %v582, 1.442695
    %v585 = vpow.pop %v584
    %v586 = vsub.f32 %v585, 1.0
    %v587 = vmul.f32 %v586, 1.6732632
    %v588 = vsel %vm583, %v582, %v587
    %s589 = sld [smem:[#allocation2 + $0x7a]]
    %v590 = vstv %s589
    %v591 = vadd.f32 %v562, %v590
    %vm592 = vcmp.gt.f32.partialorder %v591, 0.0
    %v593 = vmul.f32 %v591, 1.442695
    %v594 = vpow.pop %v593
    %v595 = vsub.f32 %v594, 1.0
    %v596 = vmul.f32 %v595, 1.6732632
    %v597 = vsel %vm592, %v591, %v596
    %s598 = sld [smem:[#allocation2 + $0x7b]]
    %v599 = vstv %s598
    %v600 = vadd.f32 %v566, %v599
    %vm601 = vcmp.gt.f32.partialorder %v600, 0.0
    %v602 = vmul.f32 %v600, 1.442695
    %v603 = vpow.pop %v602
    %v604 = vsub.f32 %v603, 1.0
    %v605 = vmul.f32 %v604, 1.6732632
    %v606 = vsel %vm601, %v600, %v605
    %s607 = sld [smem:[#allocation2 + $0x7c]]
    %v608 = vstv %s607
    %v609 = vadd.f32 %v570, %v608
    %vm610 = vcmp.gt.f32.partialorder %v609, 0.0
    %v611 = vmul.f32 %v609, 1.442695
    %v612 = vpow.pop %v611
    %v613 = vsub.f32 %v612, 1.0
    %v614 = vmul.f32 %v613, 1.6732632
    %v615 = vsel %vm610, %v609, %v614
    %s616 = sld [smem:[#allocation2 + $0x82]]
    %s617 = sld [smem:[#allocation2 + $0x7d]]
    %v618 = vstv %s617
    %v619 = vmul.f32 %v618, %v579
    %v620 = vstv %s616
    %v621 = vadd.f32 %v620, %v619
    %s622 = sld [smem:[#allocation2 + $0x7e]]
    %v623 = vstv %s622
    %v624 = vmul.f32 %v623, %v588
    %v625 = vadd.f32 %v621, %v624
    %s626 = sld [smem:[#allocation2 + $0x7f]]
    %v627 = vstv %s626
    %v628 = vmul.f32 %v627, %v597
    %v629 = vadd.f32 %v625, %v628
    %s630 = sld [smem:[#allocation2 + $0x80]]
    %v631 = vstv %s630
    %v632 = vmul.f32 %v631, %v606
    %v633 = vadd.f32 %v629, %v632
    %s634 = sld [smem:[#allocation2 + $0x81]]
    %v635 = vstv %s634
    %v636 = vmul.f32 %v635, %v615
    %v637 = vadd.f32 %v633, %v636
    %638 = vst [vmem:[#allocation7] sm:$0xff] %v637
    // Predicated region
    $region18: #{tpu_custom_call.1} parent=1 // pred_check
      _
    $region19: #{tpu_custom_call.1} parent=1 // pred_check_branch
      %640 = sbr.rel (0) target = $region21
    $region20: #{tpu_custom_call.1} parent=1 // pred_region
      %s642 = ssub.s32 128, 128
      %643 = vsyncadd [#allocation4], %s642
      %s645 = sshll.u32 [#allocation7], 4
      %s646 = int_to_ptr.vmem [resolvable:$true] %s645
      %648 = dma.vmem_to_hbm [thread:$0]  %s646, 128, %s2, [#allocation4]
    $region21: #{tpu_custom_call.1} parent=1 // pred_fallthru
      _
    // Predicated region
    $region22: #{tpu_custom_call.1} parent=1 // pred_check
      _
    $region23: #{tpu_custom_call.1} parent=1 // pred_check_branch
      %650 = sbr.rel (0) target = $region25
    $region24: #{tpu_custom_call.1} parent=1 // pred_region
      %651 = dma.done [#allocation4], 128
    $region25: #{tpu_custom_call.1} parent=1 // pred_fallthru
      _
    %652 = vsyncpa [#allocation3], 1
    %653 = vsyncpa [#allocation4], 1
    %654 = vsyncpa [#allocation5], 1

</llo_original>
